<compile_context>
chip_gen: v7x
topology: tpu7x:2x2x1
jax: 0.10.0
libtpu: 0.0.40
codegen_flags: <defaults>
</compile_context>

<pallas_src>
import math
from functools import partial

import numpy as np
import jax
import jax.numpy as jnp
from jax.experimental import pallas as pl
from jax.experimental.pallas import tpu as pltpu


def _round_up(x, m):
    return ((x + m - 1) // m) * m


# ----------------------------------------------------------------------------
# Fused kernel: all Siren layers on one batch tile.
#   x_ref  : [tile_n, dim_in]          input tile, TRUE feature width (f32)
#   w0_ref : [dim_in, dmax]            layer-0 weights, w0 folded in
#   b0_ref : [1, dmax]                 layer-0 bias (f32), w0 folded in
#   w_ref  : [num_rest, dmax, dmax]    hidden + final weights, w0 folded in
#   b_ref  : [num_rest, 1, dmax]       hidden + final biases (f32)
#   o_ref  : [tile_n, round_up(dim_out, 128)]
# ----------------------------------------------------------------------------
def _siren_fused_kernel(x_ref, w0_ref, b0_ref, w_ref, b_ref, o_ref):
    dim_in = x_ref.shape[-1]
    x = x_ref[...].astype(jnp.float32)

    # ---- layer 0: contraction width K = dim_in (tiny for coordinate nets) --
    if dim_in <= 16:
        # dim_in rank-1 updates on the VPU: avoids a full padded-width MXU
        # contraction over zero rows (saves ~1/(L+1) of all MXU work).
        w0 = w0_ref[...].astype(jnp.float32)                 # [dim_in, dmax]
        y = x[:, 0:1] * w0[0:1, :] + b0_ref[...]
        for k in range(1, dim_in):
            y = y + x[:, k:k + 1] * w0[k:k + 1, :]
    else:
        y = jnp.dot(x.astype(w0_ref.dtype), w0_ref[...],
                    preferred_element_type=jnp.float32) + b0_ref[...]
    h = jnp.sin(y)

    # ---- hidden + final layers: MXU matmuls on the VMEM-resident stack -----
    for l in range(w_ref.shape[0]):
        y = jnp.dot(h.astype(w_ref.dtype), w_ref[l],
                    preferred_element_type=jnp.float32)
        # NOTE: jnp.sin (range-reduction + polynomial on the VPU) is the likely
        # saturating slot at 128-256-wide hidden dims; check the bundle dump
        # before tuning the matmul side further.
        h = jnp.sin(y + b_ref[l])

    # Padded lanes are exactly zero (zero weights/biases, sin(0)=0); emit only
    # the lane-dense round_up(dim_out, 128) slab.
    o_ref[...] = h[:, :o_ref.shape[-1]].astype(o_ref.dtype)


def siren_net_fused(x_padded, w0_p, b0_p, w_stack, b_stack, dout_pad, *,
                    tile_n, vmem_limit_bytes):
    n_pad, dim_in = x_padded.shape
    num_rest, dmax, _ = w_stack.shape
    grid = (pl.cdiv(n_pad, tile_n),)

    flops = 2 * n_pad * (dim_in * dmax + num_rest * dmax * dmax)
    transcendentals = n_pad * dmax * (num_rest + 1)
    bytes_accessed = (x_padded.size * x_padded.dtype.itemsize
                      + n_pad * dout_pad * 4
                      + w0_p.size * w0_p.dtype.itemsize
                      + w_stack.size * w_stack.dtype.itemsize
                      + (b0_p.size + b_stack.size) * 4)

    return pl.pallas_call(
        _siren_fused_kernel,
        out_shape=jax.ShapeDtypeStruct((n_pad, dout_pad), jnp.float32),
        grid_spec=pltpu.PrefetchScalarGridSpec(
            num_scalar_prefetch=0,
            grid=grid,
            in_specs=[
                # activation tile: streams over the batch axis (pipelined)
                pl.BlockSpec((tile_n, dim_in), lambda i: (i, 0)),
                # parameters: constant block index -> fetched once, resident
                pl.BlockSpec((dim_in, dmax), lambda i: (0, 0)),
                pl.BlockSpec((1, dmax), lambda i: (0, 0)),
                pl.BlockSpec((num_rest, dmax, dmax), lambda i: (0, 0, 0)),
                pl.BlockSpec((num_rest, 1, dmax), lambda i: (0, 0, 0)),
            ],
            out_specs=pl.BlockSpec((tile_n, dout_pad), lambda i: (i, 0)),
        ),
        compiler_params=pltpu.CompilerParams(
            # batch tiles are independent -> shard across TensorCores (v7x);
            # measured no-op on v5e/v6e but harmless.
            dimension_semantics=("parallel",),
            vmem_limit_bytes=int(vmem_limit_bytes)),
        cost_estimate=pl.CostEstimate(
            flops=int(flops),
            transcendentals=int(transcendentals),
            bytes_accessed=int(bytes_accessed)),
    )(x_padded, w0_p, b0_p, w_stack, b_stack)


# ----------------------------------------------------------------------------
# Parameter construction — matches the spec's init_():
#   std = 1/sqrt(dim_in), w_std = sqrt(c)*std/w0, W ~ U(-w_std, w_std),
#   b ~ U(-std, std).  Weights stored transposed vs PyTorch: [dim_in, dim_out].
# ----------------------------------------------------------------------------
def init_siren_params(key, dim_in, dim_out, w0, c=6.0):
    std = 1.0 / math.sqrt(dim_in)
    w_std = math.sqrt(c) * std / w0
    kw, kb = jax.random.split(key)
    weight = jax.random.uniform(kw, (dim_in, dim_out), jnp.float32,
                                minval=-w_std, maxval=w_std)
    bias = jax.random.uniform(kb, (dim_out,), jnp.float32,
                              minval=-std, maxval=std)
    return weight, bias


def build_siren_net(key, dim_in, dim_hidden, dim_out, num_layers,
                    w0=1.0, w0_initial=30.0):
    params = []
    for ind in range(num_layers):
        key, sub = jax.random.split(key)
        layer_w0 = w0_initial if ind == 0 else w0
        layer_dim_in = dim_in if ind == 0 else dim_hidden
        w, b = init_siren_params(sub, layer_dim_in, dim_hidden, layer_w0)
        params.append((w, b, layer_w0))
    key, sub = jax.random.split(key)
    w, b = init_siren_params(sub, dim_hidden, dim_out, w0)
    # Per the given spec, final_activation=None -> Sine(w0) on the last layer.
    params.append((w, b, w0))
    return params


def prepare_params(params, param_dtype=jnp.bfloat16):
    """Fold w0 into W/b, pad hidden/output dims to a common 128-multiple,
    keep layer 0 unpadded along K=dim_in, stack the rest.  Done ONCE."""
    assert len(params) >= 2, "need >=1 hidden layer plus the final layer"
    w_first, b_first, w0_first = params[0]
    rest = params[1:]
    dim_in = w_first.shape[0]
    dim_out = rest[-1][0].shape[1]

    dmax = 128
    for (w, _, _) in params:
        dmax = max(dmax, _round_up(w.shape[1], 128))
    for (w, _, _) in rest:
        dmax = max(dmax, _round_up(w.shape[0], 128))
    dout_pad = _round_up(dim_out, 128)

    w0_p = jnp.zeros((dim_in, dmax), jnp.float32)
    w0_p = w0_p.at[:, :w_first.shape[1]].set(w0_first * w_first)
    b0_p = jnp.zeros((1, dmax), jnp.float32)
    b0_p = b0_p.at[0, :b_first.shape[0]].set(w0_first * b_first)

    num_rest = len(rest)
    w_stack = jnp.zeros((num_rest, dmax, dmax), jnp.float32)
    b_stack = jnp.zeros((num_rest, 1, dmax), jnp.float32)
    for l, (w, b, w0) in enumerate(rest):
        din, dout = w.shape
        w_stack = w_stack.at[l, :din, :dout].set(w0 * w)
        b_stack = b_stack.at[l, 0, :dout].set(w0 * b)

    # Weights in param_dtype (bf16 default) for MXU throughput + VMEM/DMA
    # savings; biases stay f32 (bias-add and sin run on the f32 VPU path).
    return dict(w0=w0_p.astype(param_dtype), b0=b0_p,
                w=w_stack.astype(param_dtype), b=b_stack,
                dim_in=dim_in, dim_out=dim_out, dmax=dmax, dout_pad=dout_pad)


# ----------------------------------------------------------------------------
# VMEM budget + tile selection (double-buffered IO tiles + resident params).
# ----------------------------------------------------------------------------
def _vmem_budget_bytes(tile_n, dim_in, dmax, dout_pad, num_rest, w_bytes):
    lane = lambda d: _round_up(max(d, 1), 128)
    sub = lambda d: _round_up(max(d, 1), 8)
    x_io = 2 * tile_n * lane(dim_in) * 4            # double-buffered input
    out_io = 2 * tile_n * dout_pad * 4              # double-buffered output
    w_res = 2 * (sub(dim_in) * dmax + num_rest * dmax * dmax) * w_bytes
    b_res = 2 * (num_rest + 1) * sub(1) * dmax * 4
    tmp = 3 * tile_n * dmax * 4                     # live activation temps
    return x_io + out_io + w_res + b_res + tmp


def _select_tile_and_vmem(n, dim_in, dmax, dout_pad, num_rest, w_bytes,
                          max_tile_n=512):
    budget_cap = 40 * 1024 * 1024     # comfortable headroom under v7x 64 MiB/TC
    tile_n = min(max_tile_n, _round_up(max(n, 1), 8))
    while tile_n > 8 and _vmem_budget_bytes(
            tile_n, dim_in, dmax, dout_pad, num_rest, w_bytes) > budget_cap:
        tile_n = max(8, _round_up(tile_n // 2, 8))
    # Prefer >=4 grid steps: enables software pipelining and balanced megacore
    # sharding on v7x without inflating tail padding.
    while tile_n > 64 and pl.cdiv(n, tile_n) < 4:
        tile_n = max(8, _round_up(tile_n // 2, 8))
    budget = _vmem_budget_bytes(tile_n, dim_in, dmax, dout_pad, num_rest,
                                w_bytes)
    vmem_limit = min(64 << 20, max(32 << 20, (budget * 3) // 2))
    return tile_n, vmem_limit


# ----------------------------------------------------------------------------
# Forward wrapper: batch-only padding, fused kernel, cheap final slice.
# ----------------------------------------------------------------------------
def siren_net_forward(x, prepared, *, max_tile_n=512):
    w0_p, b0_p = prepared["w0"], prepared["b0"]
    w_stack, b_stack = prepared["w"], prepared["b"]
    dim_in, dim_out = prepared["dim_in"], prepared["dim_out"]
    dmax, dout_pad = prepared["dmax"], prepared["dout_pad"]

    n, xd = x.shape
    assert xd == dim_in, (xd, dim_in)
    num_rest = w_stack.shape[0]
    w_bytes = jnp.dtype(w_stack.dtype).itemsize
    tile_n, vmem_limit = _select_tile_and_vmem(
        n, dim_in, dmax, dout_pad, num_rest, w_bytes, max_tile_n)

    n_pad = _round_up(max(n, 1), tile_n)
    x_p = x.astype(jnp.float32)
    if n_pad != n:
        # Batch-only padding to a tile multiple; feature dim stays unpadded.
        x_p = jnp.pad(x_p, ((0, n_pad - n), (0, 0)))

    out = siren_net_fused(x_p, w0_p, b0_p, w_stack, b_stack, dout_pad,
                          tile_n=tile_n, vmem_limit_bytes=vmem_limit)
    # out is [n_pad, round_up(dim_out,128)]; slice is tiny vs the old dmax slab.
    return out[:n, :dim_out]


# ----------------------------------------------------------------------------
# Exact host reference (float64, numpy) matching the PyTorch module semantics.
# ----------------------------------------------------------------------------
def siren_net_ref(x, params):
    h = np.asarray(x, dtype=np.float64)
    for (w, b, w0) in params:
        h = np.sin(w0 * (h @ np.asarray(w, np.float64)
                         + np.asarray(b, np.float64)))
    return h


if __name__ == "__main__":
    key = jax.random.PRNGKey(0)
    k_params, k_x = jax.random.split(key)

    dim_in, dim_hidden, dim_out, num_layers = 2, 32, 3, 3
    batch = 37   # deliberately not a multiple of the tile -> exercises padding

    params = build_siren_net(k_params, dim_in, dim_hidden, dim_out, num_layers,
                             w0=1.0, w0_initial=30.0)
    x = jax.random.uniform(k_x, (batch, dim_in), jnp.float32,
                           minval=-1.0, maxval=1.0)
    ref = siren_net_ref(x, params)                   # exact float64 reference

    def max_err(out):
        return float(np.max(np.abs(np.asarray(out, np.float64) - ref)))

    # 1) Exactness gate: f32 parameters, default tiling.
    prep_f32 = prepare_params(params, param_dtype=jnp.float32)
    out_f32 = jax.block_until_ready(siren_net_forward(x, prep_f32))
    assert out_f32.shape == (batch, dim_out), out_f32.shape
    e = max_err(out_f32)
    assert e < 1e-3, f"f32 path mismatch: max abs err {e}"

    # 2) Performance path: bf16 weights / matmul operands (f32 accumulate,
    #    f32 bias-add + sin).  Looser tolerance; exactness is gated by (1).
    prep_bf16 = prepare_params(params, param_dtype=jnp.bfloat16)
    out_bf16 = jax.block_until_ready(siren_net_forward(x, prep_bf16))
    assert out_bf16.shape == (batch, dim_out), out_bf16.shape
    e16 = max_err(out_bf16)
    assert e16 < 2e-1, f"bf16 path mismatch: max abs err {e16}"

    # 3) Multi-tile grid (small tile -> several pipelined grid steps).
    out_mt = jax.block_until_ready(
        siren_net_forward(x, prep_f32, max_tile_n=16))
    e_mt = max_err(out_mt)
    assert e_mt < 1e-3, f"multi-tile path mismatch: max abs err {e_mt}"

    print("KERNEL_OK")
</pallas_src>

<mosaic_0001>
module attributes {stable_mosaic.version = 11 : i64} {
  func.func @_siren_fused_kernel(%arg0: i32, %arg1: memref<40x2xf32, #tpu.memory_space<vmem>>, %arg2: memref<2x128xf32, #tpu.memory_space<vmem>>, %arg3: memref<1x128xf32, #tpu.memory_space<vmem>>, %arg4: memref<3x128x128xf32, #tpu.memory_space<vmem>>, %arg5: memref<3x1x128xf32, #tpu.memory_space<vmem>>, %arg6: memref<40x128xf32, #tpu.memory_space<vmem>>) attributes {dimension_semantics = [#tpu.dimension_semantics<parallel>], iteration_bounds = array<i64: 1>, scalar_prefetch = 0 : i64, scratch_operands = 0 : i64, tpu.core_type = #tpu.core_type<tc>, window_params = [{transform_indices = @transform_0, window_bounds = array<i64: 40, 2>}, {pipeline_mode = #tpu.pipeline_mode<synchronous>, transform_indices = @transform_1, window_bounds = array<i64: 2, 128>}, {pipeline_mode = #tpu.pipeline_mode<synchronous>, transform_indices = @transform_2, window_bounds = array<i64: 1, 128>}, {pipeline_mode = #tpu.pipeline_mode<synchronous>, transform_indices = @transform_3, window_bounds = array<i64: 3, 128, 128>}, {pipeline_mode = #tpu.pipeline_mode<synchronous>, transform_indices = @transform_4, window_bounds = array<i64: 3, 1, 128>}, {transform_indices = @transform_5, window_bounds = array<i64: 40, 128>}]} {
    %c0 = arith.constant 0 : index
    %c0_0 = arith.constant 0 : index
    %0 = vector.load %arg1[%c0, %c0_0] : memref<40x2xf32, #tpu.memory_space<vmem>>, vector<40x2xf32>
    %c0_1 = arith.constant 0 : index
    %c0_2 = arith.constant 0 : index
    %1 = vector.load %arg2[%c0_1, %c0_2] : memref<2x128xf32, #tpu.memory_space<vmem>>, vector<2x128xf32>
    %2 = vector.extract_strided_slice %0 {offsets = [0, 0], sizes = [40, 1], strides = [1, 1]} : vector<40x2xf32> to vector<40x1xf32>
    %3 = vector.extract_strided_slice %1 {offsets = [0, 0], sizes = [1, 128], strides = [1, 1]} : vector<2x128xf32> to vector<1x128xf32>
    %4 = vector.broadcast %2 : vector<40x1xf32> to vector<40x128xf32>
    %5 = vector.broadcast %3 : vector<1x128xf32> to vector<40x128xf32>
    %6 = arith.mulf %4, %5 : vector<40x128xf32>
    %c0_3 = arith.constant 0 : index
    %c0_4 = arith.constant 0 : index
    %7 = vector.load %arg3[%c0_3, %c0_4] : memref<1x128xf32, #tpu.memory_space<vmem>>, vector<1x128xf32>
    %8 = vector.broadcast %7 : vector<1x128xf32> to vector<40x128xf32>
    %9 = arith.addf %6, %8 : vector<40x128xf32>
    %10 = vector.extract_strided_slice %0 {offsets = [0, 1], sizes = [40, 1], strides = [1, 1]} : vector<40x2xf32> to vector<40x1xf32>
    %11 = vector.extract_strided_slice %1 {offsets = [1, 0], sizes = [1, 128], strides = [1, 1]} : vector<2x128xf32> to vector<1x128xf32>
    %12 = vector.broadcast %10 : vector<40x1xf32> to vector<40x128xf32>
    %13 = vector.broadcast %11 : vector<1x128xf32> to vector<40x128xf32>
    %14 = arith.mulf %12, %13 : vector<40x128xf32>
    %15 = arith.addf %9, %14 : vector<40x128xf32>
    %16 = math.sin %15 : vector<40x128xf32>
    %c0_5 = arith.constant 0 : index
    %c0_6 = arith.constant 0 : index
    %c0_7 = arith.constant 0 : index
    %17 = vector.load %arg4[%c0_5, %c0_6, %c0_7] : memref<3x128x128xf32, #tpu.memory_space<vmem>>, vector<1x128x128xf32>
    %18 = vector.shape_cast %17 : vector<1x128x128xf32> to vector<128x128xf32>
    %cst = arith.constant dense<0.000000e+00> : vector<40x128xf32>
    %19 = tpu.matmul %16, %18, %cst {dimension_numbers = #tpu.dot_dimension_numbers<[1], [0], [0], [1], [0, 0, 1, 1], [], []>} : vector<40x128xf32>, vector<128x128xf32>, vector<40x128xf32> -> vector<40x128xf32>
    %c0_8 = arith.constant 0 : index
    %c0_9 = arith.constant 0 : index
    %c0_10 = arith.constant 0 : index
    %20 = vector.load %arg5[%c0_8, %c0_9, %c0_10] : memref<3x1x128xf32, #tpu.memory_space<vmem>>, vector<1x1x128xf32>
    %21 = vector.shape_cast %20 : vector<1x1x128xf32> to vector<1x128xf32>
    %22 = vector.broadcast %21 : vector<1x128xf32> to vector<40x128xf32>
    %23 = arith.addf %19, %22 : vector<40x128xf32>
    %24 = math.sin %23 : vector<40x128xf32>
    %c1 = arith.constant 1 : index
    %c0_11 = arith.constant 0 : index
    %c0_12 = arith.constant 0 : index
    %25 = vector.load %arg4[%c1, %c0_11, %c0_12] : memref<3x128x128xf32, #tpu.memory_space<vmem>>, vector<1x128x128xf32>
    %26 = vector.shape_cast %25 : vector<1x128x128xf32> to vector<128x128xf32>
    %cst_13 = arith.constant dense<0.000000e+00> : vector<40x128xf32>
    %27 = tpu.matmul %24, %26, %cst_13 {dimension_numbers = #tpu.dot_dimension_numbers<[1], [0], [0], [1], [0, 0, 1, 1], [], []>} : vector<40x128xf32>, vector<128x128xf32>, vector<40x128xf32> -> vector<40x128xf32>
    %c1_14 = arith.constant 1 : index
    %c0_15 = arith.constant 0 : index
    %c0_16 = arith.constant 0 : index
    %28 = vector.load %arg5[%c1_14, %c0_15, %c0_16] : memref<3x1x128xf32, #tpu.memory_space<vmem>>, vector<1x1x128xf32>
    %29 = vector.shape_cast %28 : vector<1x1x128xf32> to vector<1x128xf32>
    %30 = vector.broadcast %29 : vector<1x128xf32> to vector<40x128xf32>
    %31 = arith.addf %27, %30 : vector<40x128xf32>
    %32 = math.sin %31 : vector<40x128xf32>
    %c2 = arith.constant 2 : index
    %c0_17 = arith.constant 0 : index
    %c0_18 = arith.constant 0 : index
    %33 = vector.load %arg4[%c2, %c0_17, %c0_18] : memref<3x128x128xf32, #tpu.memory_space<vmem>>, vector<1x128x128xf32>
    %34 = vector.shape_cast %33 : vector<1x128x128xf32> to vector<128x128xf32>
    %cst_19 = arith.constant dense<0.000000e+00> : vector<40x128xf32>
    %35 = tpu.matmul %32, %34, %cst_19 {dimension_numbers = #tpu.dot_dimension_numbers<[1], [0], [0], [1], [0, 0, 1, 1], [], []>} : vector<40x128xf32>, vector<128x128xf32>, vector<40x128xf32> -> vector<40x128xf32>
    %c2_20 = arith.constant 2 : index
    %c0_21 = arith.constant 0 : index
    %c0_22 = arith.constant 0 : index
    %36 = vector.load %arg5[%c2_20, %c0_21, %c0_22] : memref<3x1x128xf32, #tpu.memory_space<vmem>>, vector<1x1x128xf32>
    %37 = vector.shape_cast %36 : vector<1x1x128xf32> to vector<1x128xf32>
    %38 = vector.broadcast %37 : vector<1x128xf32> to vector<40x128xf32>
    %39 = arith.addf %35, %38 : vector<40x128xf32>
    %40 = math.sin %39 : vector<40x128xf32>
    %c0_23 = arith.constant 0 : index
    %c0_24 = arith.constant 0 : index
    %41 = vector.load %arg6[%c0_23, %c0_24] : memref<40x128xf32, #tpu.memory_space<vmem>>, vector<40x128xf32>
    tpu.vector_store %arg6[%c0_23, %c0_24], %40 {strides = array<i32>} : memref<40x128xf32, #tpu.memory_space<vmem>>, vector<40x128xf32>,
    return
  }
  func.func @transform_0(%arg0: i32) -> (i32, i32) {
    %c0_i32 = arith.constant 0 : i32
    %c0_i32_0 = arith.constant 0 : i32
    return %arg0, %c0_i32 : i32, i32
  }
  func.func @transform_1(%arg0: i32) -> (i32, i32) {
    %c0_i32 = arith.constant 0 : i32
    %c0_i32_0 = arith.constant 0 : i32
    %c0_i32_1 = arith.constant 0 : i32
    return %c0_i32, %c0_i32_0 : i32, i32
  }
  func.func @transform_2(%arg0: i32) -> (i32, i32) {
    %c0_i32 = arith.constant 0 : i32
    %c0_i32_0 = arith.constant 0 : i32
    %c0_i32_1 = arith.constant 0 : i32
    return %c0_i32, %c0_i32_0 : i32, i32
  }
  func.func @transform_3(%arg0: i32) -> (i32, i32, i32) {
    %c0_i32 = arith.constant 0 : i32
    %c0_i32_0 = arith.constant 0 : i32
    %c0_i32_1 = arith.constant 0 : i32
    %c0_i32_2 = arith.constant 0 : i32
    return %c0_i32, %c0_i32_0, %c0_i32_1 : i32, i32, i32
  }
  func.func @transform_4(%arg0: i32) -> (i32, i32, i32) {
    %c0_i32 = arith.constant 0 : i32
    %c0_i32_0 = arith.constant 0 : i32
    %c0_i32_1 = arith.constant 0 : i32
    %c0_i32_2 = arith.constant 0 : i32
    return %c0_i32, %c0_i32_0, %c0_i32_1 : i32, i32, i32
  }
  func.func @transform_5(%arg0: i32) -> (i32, i32) {
    %c0_i32 = arith.constant 0 : i32
    %c0_i32_0 = arith.constant 0 : i32
    return %arg0, %c0_i32 : i32, i32
  }
}

</mosaic_0001>

<llo_original>
// kernel: tpu_custom_call.1
$region0: #{tpu_custom_call.1}
  #allocation0 [shape = 'u32[]', space=smem, size = 0x4, offset = 0x4, fixed_abs, tag = 'smem constant byte address 0x4 - core index']
  #allocation1 [shape = 'u32[144,128]{1,0:T(1,128)}', space=vmem, size = 0x12000, scoped, tag = 'internal scratch']
  %s0 = inlined_call_operand.vmem [shape: f32[40,2], index: 0, kind: input, shape index: {}]
  %s1 = inlined_call_operand.vmem [shape: f32[2,128], index: 1, kind: input, shape index: {}]
  %s2 = inlined_call_operand.vmem [shape: f32[1,128], index: 2, kind: input, shape index: {}]
  %s3 = inlined_call_operand.hbm [shape: f32[3,128,128], index: 3, kind: input, shape index: {}]
  %s4 = inlined_call_operand.vmem [shape: f32[3,1,128], index: 4, kind: input, shape index: {}]
  %s5 = inlined_call_operand.hbm [shape: f32[40,128], index: 5, kind: output, shape index: {}]
  %s6 = sld [smem:[#allocation0]]
  $region34: #{tpu_custom_call.1} parent=0
    _
  %s8 = ssub.s32 1, %s6
  %s9 = scalar_select 0, %s8, %s6
  $region1: #{tpu_custom_call.1} parent=0
    #allocation2 [shape = 'u8[196608]{0}', space=vmem, size = 0x30000, scoped, tag = 'input window, operand 3, single buffered']
    #allocation3 [shape = 's32[1]{0}', space=sflag, size = 0x4, scoped, tag = 'scoped memory for tpu_custom_call.1']
    #allocation4 [shape = 's32[1]{0}', space=sflag, size = 0x4, scoped, tag = 'scoped memory for tpu_custom_call.1']
    #allocation5 [shape = 'u8[20480]{0}', space=vmem, size = 0x5000, scoped, tag = 'output window, operand 0, single buffered']
    %10 = vsyncpa [#allocation3], 0
    %11 = vsyncpa [#allocation4], 0
    // Predicated region
    $region2: #{tpu_custom_call.1} parent=1 // pred_check
      _
    $region3: #{tpu_custom_call.1} parent=1 // pred_check_branch
      %13 = sbr.rel (0) target = $region5
    $region4: #{tpu_custom_call.1} parent=1 // pred_region
      _
    $region5: #{tpu_custom_call.1} parent=1 // pred_fallthru
      _
    // Predicated region
    $region6: #{tpu_custom_call.1} parent=1 // pred_check
      _
    $region7: #{tpu_custom_call.1} parent=1 // pred_check_branch
      %15 = sbr.rel (0) target = $region9
    $region8: #{tpu_custom_call.1} parent=1 // pred_region
      _
    $region9: #{tpu_custom_call.1} parent=1 // pred_fallthru
      _
    // Predicated region
    $region10: #{tpu_custom_call.1} parent=1 // pred_check
      _
    $region11: #{tpu_custom_call.1} parent=1 // pred_check_branch
      %17 = sbr.rel (0) target = $region13
    $region12: #{tpu_custom_call.1} parent=1 // pred_region
      _
    $region13: #{tpu_custom_call.1} parent=1 // pred_fallthru
      _
    // Predicated region
    $region14: #{tpu_custom_call.1} parent=1 // pred_check
      _
    $region15: #{tpu_custom_call.1} parent=1 // pred_check_branch
      %19 = sbr.rel (0) target = $region17
    $region16: #{tpu_custom_call.1} parent=1 // pred_region
      %s21 = ssub.s32 6144, 6144
      %22 = vsyncadd [#allocation3], %s21
      %s23 = sshll.u32 [#allocation2], 4
      %s24 = int_to_ptr.vmem [resolvable:$true] %s23
      %29 = dma.hbm_to_vmem [thread:$0]  %s3, 6144, %s24, [#allocation3], 128, 128, 8
    $region17: #{tpu_custom_call.1} parent=1 // pred_fallthru
      _
    // Predicated region
    $region18: #{tpu_custom_call.1} parent=1 // pred_check
      _
    $region19: #{tpu_custom_call.1} parent=1 // pred_check_branch
      %31 = sbr.rel (0) target = $region21
    $region20: #{tpu_custom_call.1} parent=1 // pred_region
      _
    $region21: #{tpu_custom_call.1} parent=1 // pred_fallthru
      _
    // Predicated region
    $region22: #{tpu_custom_call.1} parent=1 // pred_check
      _
    $region23: #{tpu_custom_call.1} parent=1 // pred_check_branch
      %33 = sbr.rel (0) target = $region25
    $region24: #{tpu_custom_call.1} parent=1 // pred_region
      %34 = dma.done [#allocation3], 6144
    $region25: #{tpu_custom_call.1} parent=1 // pred_fallthru
      _
    %v35 = vld [vmem:[%s0] sm:$0xff]
    %v36 = vld [vmem:[%s0 + $0x8] sm:$0xff]
    %v37 = vld [vmem:[%s0 + $0x10] sm:$0xff]
    %v38 = vld [vmem:[%s0 + $0x18] sm:$0xff]
    %v39 = vld [vmem:[%s0 + $0x20] sm:$0xff]
    %v40 = vld [vmem:[%s1] sm:$0x3]
    %42 = vset.pattern.permute.xlu0 0
    %43 = vperm.xlu0 %42, %v35
    %v44 = vpop.permute.xlu0 %43
    %47 = vset.pattern.permute.xlu0 0
    %48 = vperm.xlu0 %47, %v36
    %v49 = vpop.permute.xlu0 %48
    %52 = vset.pattern.permute.xlu0 0
    %53 = vperm.xlu0 %52, %v37
    %v54 = vpop.permute.xlu0 %53
    %57 = vset.pattern.permute.xlu0 0
    %58 = vperm.xlu0 %57, %v38
    %v59 = vpop.permute.xlu0 %58
    %62 = vset.pattern.permute.xlu0 0
    %63 = vperm.xlu0 %62, %v39
    %v64 = vpop.permute.xlu0 %63
    %v66 = vlaneseq
    %v67 = vshrl.u32 %v66, 7
    %v68 = vsub.s32 0, %v67
    %v69 = vrot.slane %v40, %v68
    %v70 = vmul.f32 %v44, %v69
    %v71 = vmul.f32 %v49, %v69
    %v72 = vmul.f32 %v54, %v69
    %v73 = vmul.f32 %v59, %v69
    %v74 = vmul.f32 %v64, %v69
    %v75 = vld [vmem:[%s2] sm:$0x1]
    %v77 = vlaneseq
    %v78 = vshrl.u32 %v77, 7
    %v79 = vsub.s32 0, %v78
    %v80 = vrot.slane %v75, %v79
    %v82 = vadd.f32 %v70, %v80
    %v83 = vadd.f32 %v71, %v80
    %v84 = vadd.f32 %v72, %v80
    %v85 = vadd.f32 %v73, %v80
    %v86 = vadd.f32 %v74, %v80
    %87 = vset.pattern.permute.xlu0 1
    %88 = vperm.xlu0 %87, %v35
    %v89 = vpop.permute.xlu0 %88
    %91 = vset.pattern.permute.xlu0 1
    %92 = vperm.xlu0 %91, %v36
    %v93 = vpop.permute.xlu0 %92
    %95 = vset.pattern.permute.xlu0 1
    %96 = vperm.xlu0 %95, %v37
    %v97 = vpop.permute.xlu0 %96
    %99 = vset.pattern.permute.xlu0 1
    %100 = vperm.xlu0 %99, %v38
    %v101 = vpop.permute.xlu0 %100
    %103 = vset.pattern.permute.xlu0 1
    %104 = vperm.xlu0 %103, %v39
    %v105 = vpop.permute.xlu0 %104
    %v107 = vlaneseq
    %v108 = vshrl.u32 %v107, 7
    %v109 = vsub.s32 1, %v108
    %v110 = vrot.slane %v40, %v109
    %v111 = vmul.f32 %v89, %v110
    %v112 = vmul.f32 %v93, %v110
    %v113 = vmul.f32 %v97, %v110
    %v114 = vmul.f32 %v101, %v110
    %v115 = vmul.f32 %v105, %v110
    %v116 = vadd.f32 %v82, %v111
    %v117 = vadd.f32 %v83, %v112
    %v118 = vadd.f32 %v84, %v113
    %v119 = vadd.f32 %v85, %v114
    %v120 = vadd.f32 %v86, %v115
    %v121 = vand.u32 2147483647, %v116
    %vm122 = vcmp.le.f32.partialorder %v121, 0.7853982
    %vm123 = vcmp.lt.s32.totalorder %v116, 0
    %v124 = vand.u32 %v116, 2139095040
    %v125 = vshrl.u32 %v124, 23
    %v126 = vsub.s32 %v125, 127
    %v127 = vand.u32 2147483647, %v116
    %v128 = vand.u32 %v127, 8388607
    %v129 = vor.u32 %v128, 8388608
    %v130 = vsub.s32 0, %v129
    %v131 = vadd.s32 %v126, 1
    %vm132 = vcmp.gt.s32.totalorder %v131, 0
    %v133 = vsel %vm132, %v131, 0
    %v134 = vshrl.u32 %v133, 5
    %v135 = vand.u32 %v133, 31
    %v136 = vsub.s32 32, %v135
    %v137 = vshrl.u32 683565275, %v136
    %v138 = vshll.u32 683565275, %v135
    %v139 = vshrl.u32 2475754826, %v136
    %v140 = vor.u32 %v138, %v139
    %v141 = vshll.u32 2475754826, %v135
    %v142 = vshrl.u32 2131351028, %v136
    %v143 = vor.u32 %v141, %v142
    %v144 = vshll.u32 2131351028, %v135
    %v145 = vshrl.u32 2102212464, %v136
    %v146 = vor.u32 %v144, %v145
    %v147 = vshll.u32 2102212464, %v135
    %v148 = vshrl.u32 920167782, %v136
    %v149 = vor.u32 %v147, %v148
    %v150 = vshll.u32 920167782, %v135
    %v151 = vshrl.u32 1326507024, %v136
    %v152 = vor.u32 %v150, %v151
    %vm153 = vcmp.lt.s32.totalorder %v134, 1
    %vm154 = vcmp.lt.s32.totalorder %v134, 2
    %vm155 = vcmp.lt.s32.totalorder %v134, 3
    %vm156 = vcmp.lt.s32.totalorder %v134, 4
    %v157 = vsel %vm153, %v137, %v140
    %v158 = vsel %vm156, %v146, 2102212464
    %v159 = vsel %vm155, %v143, %v158
    %v160 = vsel %vm154, %v157, %v159
    %v161 = vsel %vm153, %v140, %v143
    %v162 = vsel %vm156, %v149, 920167782
    %v163 = vsel %vm155, %v146, %v162
    %v164 = vsel %vm154, %v161, %v163
    %v165 = vsel %vm153, %v143, %v146
    %v166 = vsel %vm156, %v152, 1326507024
    %v167 = vsel %vm155, %v149, %v166
    %v168 = vsel %vm154, %v165, %v167
    %v169 = vshll.u32 %v129, 8
    %v170 = vmul.u32.u64.compose %v169, %v168
    %v171 = vextract.low.u32 %v170
    %v172 = vextract.high.u32 %v170
    %v173 = vmul.u32.u64.compose %v169, %v164
    %v174 = vextract.low.u32 %v173
    %v175 = vextract.high.u32 %v173
    %v176 = vmul.u32 %v169, %v160
    %v177 = vadd.s32 %v172, %v174
    %vm178 = vc.u32 %v172, %v174
    %v179 = vadd.s32 %v175, 1
    %v180 = vsel %vm178, %v179, %v175
    %v181 = vadd.s32 %v176, %v180
    %v182 = vadd.s32 %v181, 536870912
    %v183 = vshrl.u32 %v182, 30
    %v184 = vshll.u32 %v183, 30
    %v185 = vsub.s32 %v181, %v184
    %vm186 = vcmp.lt.s32.totalorder %v185, 0
    %v187 = vsub.s32 0, %v185
    %v188 = vsel %vm186, %v187, %v185
    %v189 = vclz %v188
    %v190 = vsub.s32 %v189, 2
    %vm191 = vcmp.gt.s32.totalorder 0, %v190
    %v192 = vsel %vm191, 0, %v190
    %v193 = vsub.s32 32, %v192
    %v194 = vshll.u32 %v185, %v192
    %v195 = vshrl.u32 %v177, %v193
    %v196 = vor.u32 %v194, %v195
    %v197 = vsub.s32 4294967266, %v192
    %v198 = vadd.s32 %v197, 127
    %v199 = vshll.u32 %v198, 23
    %v200 = vor.u32 4788187, %v199
    %v201 = vand.u32 2147483647, %v200
    %v203 = vcvt.s32.f32 %v196
    %v204 = vmul.f32 %v203, %v201
    %v205 = vxor.u32 %v204, 2147483648
    %v206 = vsel %vm123, %v205, %v204
    %v207 = vsub.s32 4, %v183
    %v208 = vsel %vm123, %v207, %v183
    %v209 = vsel %vm122, %v116, %v206
    %v210 = vsel %vm122, 0, %v208
    %v211 = vcosq.f32.pop %v209
    %v212 = vsinq.f32.pop %v209
    %vm213 = vweird.f32 %v116
    %v214 = vadd.s32 %v210, 3
    %v215 = vand.u32 %v214, 3
    %vm216 = vcmp.lt.s32.totalorder %v215, 2
    %vm217 = vcmp.eq.s32.totalorder %v215, 0
    %v218 = vxor.u32 %v212, 2147483648
    %v219 = vsel %vm217, %v211, %v218
    %vm220 = vcmp.eq.s32.totalorder %v215, 2
    %v221 = vxor.u32 %v211, 2147483648
    %v222 = vsel %vm220, %v221, %v212
    %v223 = vsel %vm216, %v219, %v222
    %v224 = vsel %vm213, nan, %v223
    %v225 = vand.u32 2147483647, %v117
    %vm226 = vcmp.le.f32.partialorder %v225, 0.7853982
    %vm227 = vcmp.lt.s32.totalorder %v117, 0
    %v228 = vand.u32 %v117, 2139095040
    %v229 = vshrl.u32 %v228, 23
    %v230 = vsub.s32 %v229, 127
    %v231 = vand.u32 2147483647, %v117
    %v232 = vand.u32 %v231, 8388607
    %v233 = vor.u32 %v232, 8388608
    %v234 = vsub.s32 0, %v233
    %v235 = vadd.s32 %v230, 1
    %vm236 = vcmp.gt.s32.totalorder %v235, 0
    %v237 = vsel %vm236, %v235, 0
    %v238 = vshrl.u32 %v237, 5
    %v239 = vand.u32 %v237, 31
    %v240 = vsub.s32 32, %v239
    %v241 = vshrl.u32 683565275, %v240
    %v242 = vshll.u32 683565275, %v239
    %v243 = vshrl.u32 2475754826, %v240
    %v244 = vor.u32 %v242, %v243
    %v245 = vshll.u32 2475754826, %v239
    %v246 = vshrl.u32 2131351028, %v240
    %v247 = vor.u32 %v245, %v246
    %v248 = vshll.u32 2131351028, %v239
    %v249 = vshrl.u32 2102212464, %v240
    %v250 = vor.u32 %v248, %v249
    %v251 = vshll.u32 2102212464, %v239
    %v252 = vshrl.u32 920167782, %v240
    %v253 = vor.u32 %v251, %v252
    %v254 = vshll.u32 920167782, %v239
    %v255 = vshrl.u32 1326507024, %v240
    %v256 = vor.u32 %v254, %v255
    %vm257 = vcmp.lt.s32.totalorder %v238, 1
    %vm258 = vcmp.lt.s32.totalorder %v238, 2
    %vm259 = vcmp.lt.s32.totalorder %v238, 3
    %vm260 = vcmp.lt.s32.totalorder %v238, 4
    %v261 = vsel %vm257, %v241, %v244
    %v262 = vsel %vm260, %v250, 2102212464
    %v263 = vsel %vm259, %v247, %v262
    %v264 = vsel %vm258, %v261, %v263
    %v265 = vsel %vm257, %v244, %v247
    %v266 = vsel %vm260, %v253, 920167782
    %v267 = vsel %vm259, %v250, %v266
    %v268 = vsel %vm258, %v265, %v267
    %v269 = vsel %vm257, %v247, %v250
    %v270 = vsel %vm260, %v256, 1326507024
    %v271 = vsel %vm259, %v253, %v270
    %v272 = vsel %vm258, %v269, %v271
    %v273 = vshll.u32 %v233, 8
    %v274 = vmul.u32.u64.compose %v273, %v272
    %v275 = vextract.low.u32 %v274
    %v276 = vextract.high.u32 %v274
    %v277 = vmul.u32.u64.compose %v273, %v268
    %v278 = vextract.low.u32 %v277
    %v279 = vextract.high.u32 %v277
    %v280 = vmul.u32 %v273, %v264
    %v281 = vadd.s32 %v276, %v278
    %vm282 = vc.u32 %v276, %v278
    %v283 = vadd.s32 %v279, 1
    %v284 = vsel %vm282, %v283, %v279
    %v285 = vadd.s32 %v280, %v284
    %v286 = vadd.s32 %v285, 536870912
    %v287 = vshrl.u32 %v286, 30
    %v288 = vshll.u32 %v287, 30
    %v289 = vsub.s32 %v285, %v288
    %vm290 = vcmp.lt.s32.totalorder %v289, 0
    %v291 = vsub.s32 0, %v289
    %v292 = vsel %vm290, %v291, %v289
    %v293 = vclz %v292
    %v294 = vsub.s32 %v293, 2
    %vm295 = vcmp.gt.s32.totalorder 0, %v294
    %v296 = vsel %vm295, 0, %v294
    %v297 = vsub.s32 32, %v296
    %v298 = vshll.u32 %v289, %v296
    %v299 = vshrl.u32 %v281, %v297
    %v300 = vor.u32 %v298, %v299
    %v301 = vsub.s32 4294967266, %v296
    %v302 = vadd.s32 %v301, 127
    %v303 = vshll.u32 %v302, 23
    %v304 = vor.u32 4788187, %v303
    %v305 = vand.u32 2147483647, %v304
    %v307 = vcvt.s32.f32 %v300
    %v308 = vmul.f32 %v307, %v305
    %v309 = vxor.u32 %v308, 2147483648
    %v310 = vsel %vm227, %v309, %v308
    %v311 = vsub.s32 4, %v287
    %v312 = vsel %vm227, %v311, %v287
    %v313 = vsel %vm226, %v117, %v310
    %v314 = vsel %vm226, 0, %v312
    %v315 = vcosq.f32.pop %v313
    %v316 = vsinq.f32.pop %v313
    %vm317 = vweird.f32 %v117
    %v318 = vadd.s32 %v314, 3
    %v319 = vand.u32 %v318, 3
    %vm320 = vcmp.lt.s32.totalorder %v319, 2
    %vm321 = vcmp.eq.s32.totalorder %v319, 0
    %v322 = vxor.u32 %v316, 2147483648
    %v323 = vsel %vm321, %v315, %v322
    %vm324 = vcmp.eq.s32.totalorder %v319, 2
    %v325 = vxor.u32 %v315, 2147483648
    %v326 = vsel %vm324, %v325, %v316
    %v327 = vsel %vm320, %v323, %v326
    %v328 = vsel %vm317, nan, %v327
    %v329 = vand.u32 2147483647, %v118
    %vm330 = vcmp.le.f32.partialorder %v329, 0.7853982
    %vm331 = vcmp.lt.s32.totalorder %v118, 0
    %v332 = vand.u32 %v118, 2139095040
    %v333 = vshrl.u32 %v332, 23
    %v334 = vsub.s32 %v333, 127
    %v335 = vand.u32 2147483647, %v118
    %v336 = vand.u32 %v335, 8388607
    %v337 = vor.u32 %v336, 8388608
    %v338 = vsub.s32 0, %v337
    %v339 = vadd.s32 %v334, 1
    %vm340 = vcmp.gt.s32.totalorder %v339, 0
    %v341 = vsel %vm340, %v339, 0
    %v342 = vshrl.u32 %v341, 5
    %v343 = vand.u32 %v341, 31
    %v344 = vsub.s32 32, %v343
    %v345 = vshrl.u32 683565275, %v344
    %v346 = vshll.u32 683565275, %v343
    %v347 = vshrl.u32 2475754826, %v344
    %v348 = vor.u32 %v346, %v347
    %v349 = vshll.u32 2475754826, %v343
    %v350 = vshrl.u32 2131351028, %v344
    %v351 = vor.u32 %v349, %v350
    %v352 = vshll.u32 2131351028, %v343
    %v353 = vshrl.u32 2102212464, %v344
    %v354 = vor.u32 %v352, %v353
    %v355 = vshll.u32 2102212464, %v343
    %v356 = vshrl.u32 920167782, %v344
    %v357 = vor.u32 %v355, %v356
    %v358 = vshll.u32 920167782, %v343
    %v359 = vshrl.u32 1326507024, %v344
    %v360 = vor.u32 %v358, %v359
    %vm361 = vcmp.lt.s32.totalorder %v342, 1
    %vm362 = vcmp.lt.s32.totalorder %v342, 2
    %vm363 = vcmp.lt.s32.totalorder %v342, 3
    %vm364 = vcmp.lt.s32.totalorder %v342, 4
    %v365 = vsel %vm361, %v345, %v348
    %v366 = vsel %vm364, %v354, 2102212464
    %v367 = vsel %vm363, %v351, %v366
    %v368 = vsel %vm362, %v365, %v367
    %v369 = vsel %vm361, %v348, %v351
    %v370 = vsel %vm364, %v357, 920167782
    %v371 = vsel %vm363, %v354, %v370
    %v372 = vsel %vm362, %v369, %v371
    %v373 = vsel %vm361, %v351, %v354
    %v374 = vsel %vm364, %v360, 1326507024
    %v375 = vsel %vm363, %v357, %v374
    %v376 = vsel %vm362, %v373, %v375
    %v377 = vshll.u32 %v337, 8
    %v378 = vmul.u32.u64.compose %v377, %v376
    %v379 = vextract.low.u32 %v378
    %v380 = vextract.high.u32 %v378
    %v381 = vmul.u32.u64.compose %v377, %v372
    %v382 = vextract.low.u32 %v381
    %v383 = vextract.high.u32 %v381
    %v384 = vmul.u32 %v377, %v368
    %v385 = vadd.s32 %v380, %v382
    %vm386 = vc.u32 %v380, %v382
    %v387 = vadd.s32 %v383, 1
    %v388 = vsel %vm386, %v387, %v383
    %v389 = vadd.s32 %v384, %v388
    %v390 = vadd.s32 %v389, 536870912
    %v391 = vshrl.u32 %v390, 30
    %v392 = vshll.u32 %v391, 30
    %v393 = vsub.s32 %v389, %v392
    %vm394 = vcmp.lt.s32.totalorder %v393, 0
    %v395 = vsub.s32 0, %v393
    %v396 = vsel %vm394, %v395, %v393
    %v397 = vclz %v396
    %v398 = vsub.s32 %v397, 2
    %vm399 = vcmp.gt.s32.totalorder 0, %v398
    %v400 = vsel %vm399, 0, %v398
    %v401 = vsub.s32 32, %v400
    %v402 = vshll.u32 %v393, %v400
    %v403 = vshrl.u32 %v385, %v401
    %v404 = vor.u32 %v402, %v403
    %v405 = vsub.s32 4294967266, %v400
    %v406 = vadd.s32 %v405, 127
    %v407 = vshll.u32 %v406, 23
    %v408 = vor.u32 4788187, %v407
    %v409 = vand.u32 2147483647, %v408
    %v411 = vcvt.s32.f32 %v404
    %v412 = vmul.f32 %v411, %v409
    %v413 = vxor.u32 %v412, 2147483648
    %v414 = vsel %vm331, %v413, %v412
    %v415 = vsub.s32 4, %v391
    %v416 = vsel %vm331, %v415, %v391
    %v417 = vsel %vm330, %v118, %v414
    %v418 = vsel %vm330, 0, %v416
    %v419 = vcosq.f32.pop %v417
    %v420 = vsinq.f32.pop %v417
    %vm421 = vweird.f32 %v118
    %v422 = vadd.s32 %v418, 3
    %v423 = vand.u32 %v422, 3
    %vm424 = vcmp.lt.s32.totalorder %v423, 2
    %vm425 = vcmp.eq.s32.totalorder %v423, 0
    %v426 = vxor.u32 %v420, 2147483648
    %v427 = vsel %vm425, %v419, %v426
    %vm428 = vcmp.eq.s32.totalorder %v423, 2
    %v429 = vxor.u32 %v419, 2147483648
    %v430 = vsel %vm428, %v429, %v420
    %v431 = vsel %vm424, %v427, %v430
    %v432 = vsel %vm421, nan, %v431
    %v433 = vand.u32 2147483647, %v119
    %vm434 = vcmp.le.f32.partialorder %v433, 0.7853982
    %vm435 = vcmp.lt.s32.totalorder %v119, 0
    %v436 = vand.u32 %v119, 2139095040
    %v437 = vshrl.u32 %v436, 23
    %v438 = vsub.s32 %v437, 127
    %v439 = vand.u32 2147483647, %v119
    %v440 = vand.u32 %v439, 8388607
    %v441 = vor.u32 %v440, 8388608
    %v442 = vsub.s32 0, %v441
    %v443 = vadd.s32 %v438, 1
    %vm444 = vcmp.gt.s32.totalorder %v443, 0
    %v445 = vsel %vm444, %v443, 0
    %v446 = vshrl.u32 %v445, 5
    %v447 = vand.u32 %v445, 31
    %v448 = vsub.s32 32, %v447
    %v449 = vshrl.u32 683565275, %v448
    %v450 = vshll.u32 683565275, %v447
    %v451 = vshrl.u32 2475754826, %v448
    %v452 = vor.u32 %v450, %v451
    %v453 = vshll.u32 2475754826, %v447
    %v454 = vshrl.u32 2131351028, %v448
    %v455 = vor.u32 %v453, %v454
    %v456 = vshll.u32 2131351028, %v447
    %v457 = vshrl.u32 2102212464, %v448
    %v458 = vor.u32 %v456, %v457
    %v459 = vshll.u32 2102212464, %v447
    %v460 = vshrl.u32 920167782, %v448
    %v461 = vor.u32 %v459, %v460
    %v462 = vshll.u32 920167782, %v447
    %v463 = vshrl.u32 1326507024, %v448
    %v464 = vor.u32 %v462, %v463
    %vm465 = vcmp.lt.s32.totalorder %v446, 1
    %vm466 = vcmp.lt.s32.totalorder %v446, 2
    %vm467 = vcmp.lt.s32.totalorder %v446, 3
    %vm468 = vcmp.lt.s32.totalorder %v446, 4
    %v469 = vsel %vm465, %v449, %v452
    %v470 = vsel %vm468, %v458, 2102212464
    %v471 = vsel %vm467, %v455, %v470
    %v472 = vsel %vm466, %v469, %v471
    %v473 = vsel %vm465, %v452, %v455
    %v474 = vsel %vm468, %v461, 920167782
    %v475 = vsel %vm467, %v458, %v474
    %v476 = vsel %vm466, %v473, %v475
    %v477 = vsel %vm465, %v455, %v458
    %v478 = vsel %vm468, %v464, 1326507024
    %v479 = vsel %vm467, %v461, %v478
    %v480 = vsel %vm466, %v477, %v479
    %v481 = vshll.u32 %v441, 8
    %v482 = vmul.u32.u64.compose %v481, %v480
    %v483 = vextract.low.u32 %v482
    %v484 = vextract.high.u32 %v482
    %v485 = vmul.u32.u64.compose %v481, %v476
    %v486 = vextract.low.u32 %v485
    %v487 = vextract.high.u32 %v485
    %v488 = vmul.u32 %v481, %v472
    %v489 = vadd.s32 %v484, %v486
    %vm490 = vc.u32 %v484, %v486
    %v491 = vadd.s32 %v487, 1
    %v492 = vsel %vm490, %v491, %v487
    %v493 = vadd.s32 %v488, %v492
    %v494 = vadd.s32 %v493, 536870912
    %v495 = vshrl.u32 %v494, 30
    %v496 = vshll.u32 %v495, 30
    %v497 = vsub.s32 %v493, %v496
    %vm498 = vcmp.lt.s32.totalorder %v497, 0
    %v499 = vsub.s32 0, %v497
    %v500 = vsel %vm498, %v499, %v497
    %v501 = vclz %v500
    %v502 = vsub.s32 %v501, 2
    %vm503 = vcmp.gt.s32.totalorder 0, %v502
    %v504 = vsel %vm503, 0, %v502
    %v505 = vsub.s32 32, %v504
    %v506 = vshll.u32 %v497, %v504
    %v507 = vshrl.u32 %v489, %v505
    %v508 = vor.u32 %v506, %v507
    %v509 = vsub.s32 4294967266, %v504
    %v510 = vadd.s32 %v509, 127
    %v511 = vshll.u32 %v510, 23
    %v512 = vor.u32 4788187, %v511
    %v513 = vand.u32 2147483647, %v512
    %v515 = vcvt.s32.f32 %v508
    %v516 = vmul.f32 %v515, %v513
    %v517 = vxor.u32 %v516, 2147483648
    %v518 = vsel %vm435, %v517, %v516
    %v519 = vsub.s32 4, %v495
    %v520 = vsel %vm435, %v519, %v495
    %v521 = vsel %vm434, %v119, %v518
    %v522 = vsel %vm434, 0, %v520
    %v523 = vcosq.f32.pop %v521
    %v524 = vsinq.f32.pop %v521
    %vm525 = vweird.f32 %v119
    %v526 = vadd.s32 %v522, 3
    %v527 = vand.u32 %v526, 3
    %vm528 = vcmp.lt.s32.totalorder %v527, 2
    %vm529 = vcmp.eq.s32.totalorder %v527, 0
    %v530 = vxor.u32 %v524, 2147483648
    %v531 = vsel %vm529, %v523, %v530
    %vm532 = vcmp.eq.s32.totalorder %v527, 2
    %v533 = vxor.u32 %v523, 2147483648
    %v534 = vsel %vm532, %v533, %v524
    %v535 = vsel %vm528, %v531, %v534
    %v536 = vsel %vm525, nan, %v535
    %v537 = vand.u32 2147483647, %v120
    %vm538 = vcmp.le.f32.partialorder %v537, 0.7853982
    %vm539 = vcmp.lt.s32.totalorder %v120, 0
    %v540 = vand.u32 %v120, 2139095040
    %v541 = vshrl.u32 %v540, 23
    %v542 = vsub.s32 %v541, 127
    %v543 = vand.u32 2147483647, %v120
    %v544 = vand.u32 %v543, 8388607
    %v545 = vor.u32 %v544, 8388608
    %v546 = vsub.s32 0, %v545
    %v547 = vadd.s32 %v542, 1
    %vm548 = vcmp.gt.s32.totalorder %v547, 0
    %v549 = vsel %vm548, %v547, 0
    %v550 = vshrl.u32 %v549, 5
    %v551 = vand.u32 %v549, 31
    %v552 = vsub.s32 32, %v551
    %v553 = vshrl.u32 683565275, %v552
    %v554 = vshll.u32 683565275, %v551
    %v555 = vshrl.u32 2475754826, %v552
    %v556 = vor.u32 %v554, %v555
    %v557 = vshll.u32 2475754826, %v551
    %v558 = vshrl.u32 2131351028, %v552
    %v559 = vor.u32 %v557, %v558
    %v560 = vshll.u32 2131351028, %v551
    %v561 = vshrl.u32 2102212464, %v552
    %v562 = vor.u32 %v560, %v561
    %v563 = vshll.u32 2102212464, %v551
    %v564 = vshrl.u32 920167782, %v552
    %v565 = vor.u32 %v563, %v564
    %v566 = vshll.u32 920167782, %v551
    %v567 = vshrl.u32 1326507024, %v552
    %v568 = vor.u32 %v566, %v567
    %vm569 = vcmp.lt.s32.totalorder %v550, 1
    %vm570 = vcmp.lt.s32.totalorder %v550, 2
    %vm571 = vcmp.lt.s32.totalorder %v550, 3
    %vm572 = vcmp.lt.s32.totalorder %v550, 4
    %v573 = vsel %vm569, %v553, %v556
    %v574 = vsel %vm572, %v562, 2102212464
    %v575 = vsel %vm571, %v559, %v574
    %v576 = vsel %vm570, %v573, %v575
    %v577 = vsel %vm569, %v556, %v559
    %v578 = vsel %vm572, %v565, 920167782
    %v579 = vsel %vm571, %v562, %v578
    %v580 = vsel %vm570, %v577, %v579
    %v581 = vsel %vm569, %v559, %v562
    %v582 = vsel %vm572, %v568, 1326507024
    %v583 = vsel %vm571, %v565, %v582
    %v584 = vsel %vm570, %v581, %v583
    %v585 = vshll.u32 %v545, 8
    %v586 = vmul.u32.u64.compose %v585, %v584
    %v587 = vextract.low.u32 %v586
    %v588 = vextract.high.u32 %v586
    %v589 = vmul.u32.u64.compose %v585, %v580
    %v590 = vextract.low.u32 %v589
    %v591 = vextract.high.u32 %v589
    %v592 = vmul.u32 %v585, %v576
    %v593 = vadd.s32 %v588, %v590
    %vm594 = vc.u32 %v588, %v590
    %v595 = vadd.s32 %v591, 1
    %v596 = vsel %vm594, %v595, %v591
    %v597 = vadd.s32 %v592, %v596
    %v598 = vadd.s32 %v597, 536870912
    %v599 = vshrl.u32 %v598, 30
    %v600 = vshll.u32 %v599, 30
    %v601 = vsub.s32 %v597, %v600
    %vm602 = vcmp.lt.s32.totalorder %v601, 0
    %v603 = vsub.s32 0, %v601
    %v604 = vsel %vm602, %v603, %v601
    %v605 = vclz %v604
    %v606 = vsub.s32 %v605, 2
    %vm607 = vcmp.gt.s32.totalorder 0, %v606
    %v608 = vsel %vm607, 0, %v606
    %v609 = vsub.s32 32, %v608
    %v610 = vshll.u32 %v601, %v608
    %v611 = vshrl.u32 %v593, %v609
    %v612 = vor.u32 %v610, %v611
    %v613 = vsub.s32 4294967266, %v608
    %v614 = vadd.s32 %v613, 127
    %v615 = vshll.u32 %v614, 23
    %v616 = vor.u32 4788187, %v615
    %v617 = vand.u32 2147483647, %v616
    %v619 = vcvt.s32.f32 %v612
    %v620 = vmul.f32 %v619, %v617
    %v621 = vxor.u32 %v620, 2147483648
    %v622 = vsel %vm539, %v621, %v620
    %v623 = vsub.s32 4, %v599
    %v624 = vsel %vm539, %v623, %v599
    %v625 = vsel %vm538, %v120, %v622
    %v626 = vsel %vm538, 0, %v624
    %v627 = vcosq.f32.pop %v625
    %v628 = vsinq.f32.pop %v625
    %vm629 = vweird.f32 %v120
    %v630 = vadd.s32 %v626, 3
    %v631 = vand.u32 %v630, 3
    %vm632 = vcmp.lt.s32.totalorder %v631, 2
    %vm633 = vcmp.eq.s32.totalorder %v631, 0
    %v634 = vxor.u32 %v628, 2147483648
    %v635 = vsel %vm633, %v627, %v634
    %vm636 = vcmp.eq.s32.totalorder %v631, 2
    %v637 = vxor.u32 %v627, 2147483648
    %v638 = vsel %vm636, %v637, %v628
    %v639 = vsel %vm632, %v635, %v638
    %v640 = vsel %vm629, nan, %v639
    %v641 = vld [vmem:[#allocation2] sm:$0xff]
    %v642 = vld [vmem:[#allocation2 + $0x8] sm:$0xff]
    %v643 = vld [vmem:[#allocation2 + $0x10] sm:$0xff]
    %v644 = vld [vmem:[#allocation2 + $0x18] sm:$0xff]
    %v645 = vld [vmem:[#allocation2 + $0x20] sm:$0xff]
    %v646 = vld [vmem:[#allocation2 + $0x28] sm:$0xff]
    %v647 = vld [vmem:[#allocation2 + $0x30] sm:$0xff]
    %v648 = vld [vmem:[#allocation2 + $0x38] sm:$0xff]
    %v649 = vld [vmem:[#allocation2 + $0x40] sm:$0xff]
    %v650 = vld [vmem:[#allocation2 + $0x48] sm:$0xff]
    %v651 = vld [vmem:[#allocation2 + $0x50] sm:$0xff]
    %v652 = vld [vmem:[#allocation2 + $0x58] sm:$0xff]
    %v653 = vld [vmem:[#allocation2 + $0x60] sm:$0xff]
    %v654 = vld [vmem:[#allocation2 + $0x68] sm:$0xff]
    %v655 = vld [vmem:[#allocation2 + $0x70] sm:$0xff]
    %v656 = vld [vmem:[#allocation2 + $0x78] sm:$0xff]
    %v657 = vld [vmem:[%s4] sm:$0x1]
    %v659 = vlaneseq
    %v660 = vshrl.u32 %v659, 7
    %v661 = vsub.s32 0, %v660
    %v662 = vrot.slane %v657, %v661
    %664 = vmatprep.subr.mxu0 0.0
    %665 = vmatpush1.msra.mxu0 %v641
    %666 = vmatprep.subr.mxu0 0.0
    %667 = vmatpush1.msra.mxu0 %v642
    %668 = vmatprep.subr.mxu0 0.0
    %669 = vmatpush1.msra.mxu0 %v643
    %670 = vmatprep.subr.mxu0 0.0
    %671 = vmatpush1.msra.mxu0 %v644
    %672 = vmatprep.subr.mxu0 0.0
    %673 = vmatpush1.msra.mxu0 %v645
    %674 = vmatprep.subr.mxu0 0.0
    %675 = vmatpush1.msra.mxu0 %v646
    %676 = vmatprep.subr.mxu0 0.0
    %677 = vmatpush1.msra.mxu0 %v647
    %678 = vmatprep.subr.mxu0 0.0
    %679 = vmatpush1.msra.mxu0 %v648
    %680 = vmatprep.subr.mxu0 0.0
    %681 = vmatpush1.msra.mxu0 %v649
    %682 = vmatprep.subr.mxu0 0.0
    %683 = vmatpush1.msra.mxu0 %v650
    %684 = vmatprep.subr.mxu0 0.0
    %685 = vmatpush1.msra.mxu0 %v651
    %686 = vmatprep.subr.mxu0 0.0
    %687 = vmatpush1.msra.mxu0 %v652
    %688 = vmatprep.subr.mxu0 0.0
    %689 = vmatpush1.msra.mxu0 %v653
    %690 = vmatprep.subr.mxu0 0.0
    %691 = vmatpush1.msra.mxu0 %v654
    %692 = vmatprep.subr.mxu0 0.0
    %693 = vmatpush1.msra.mxu0 %v655
    %694 = vmatprep.subr.mxu0 0.0
    %695 = vmatpush1.msra.mxu0 %v656
    %696 = vmatprep.subr.mxu0 0.0
    %697 = vmatpush1.msra.mxu0 0.0
    %698 = vmatprep.subr.mxu0 0.0
    %699 = vmatpush1.msra.mxu0 0.0
    %700 = vmatprep.subr.mxu0 0.0
    %701 = vmatpush1.msra.mxu0 0.0
    %702 = vmatprep.subr.mxu0 0.0
    %703 = vmatpush1.msra.mxu0 0.0
    %704 = vmatprep.subr.mxu0 0.0
    %705 = vmatpush1.msra.mxu0 0.0
    %706 = vmatprep.subr.mxu0 0.0
    %707 = vmatpush1.msra.mxu0 0.0
    %708 = vmatprep.subr.mxu0 0.0
    %709 = vmatpush1.msra.mxu0 0.0
    %710 = vmatprep.subr.mxu0 0.0
    %711 = vmatpush1.msra.mxu0 0.0
    %712 = vmatprep.subr.mxu0 0.0
    %713 = vmatpush1.msra.mxu0 0.0
    %714 = vmatprep.subr.mxu0 0.0
    %715 = vmatpush1.msra.mxu0 0.0
    %716 = vmatprep.subr.mxu0 0.0
    %717 = vmatpush1.msra.mxu0 0.0
    %718 = vmatprep.subr.mxu0 0.0
    %719 = vmatpush1.msra.mxu0 0.0
    %720 = vmatprep.subr.mxu0 0.0
    %721 = vmatpush1.msra.mxu0 0.0
    %722 = vmatprep.subr.mxu0 0.0
    %723 = vmatpush1.msra.mxu0 0.0
    %724 = vmatprep.subr.mxu0 0.0
    %725 = vmatpush1.msra.mxu0 0.0
    %726 = vmatprep.subr.mxu0 0.0
    %727 = vmatpush1.msra.mxu0 0.0
    %728 = vmatprep.mubr.f32.mxu0 0.0
    %729 = vmatmul.mubr.f32.gmra.mrb[0].mxu0 %v224
    %v730 = vpop.f32.mrb[0].mxu0
    %v731 = vadd.f32 %v662, %v730
    %v732 = vpop.f32.mrb[0].mxu0
    %733 = vmatprep.mubr.f32.mxu0 0.0
    %734 = vmatmul.mubr.f32.gmra.mrb[0].mxu0 %v328
    %v735 = vpop.f32.mrb[0].mxu0
    %v736 = vadd.f32 %v662, %v735
    %v737 = vpop.f32.mrb[0].mxu0
    %738 = vmatprep.mubr.f32.mxu0 0.0
    %739 = vmatmul.mubr.f32.gmra.mrb[0].mxu0 %v432
    %v740 = vpop.f32.mrb[0].mxu0
    %v741 = vadd.f32 %v662, %v740
    %v742 = vpop.f32.mrb[0].mxu0
    %743 = vmatprep.mubr.f32.mxu0 0.0
    %744 = vmatmul.mubr.f32.gmra.mrb[0].mxu0 %v536
    %v745 = vpop.f32.mrb[0].mxu0
    %v746 = vadd.f32 %v662, %v745
    %v747 = vpop.f32.mrb[0].mxu0
    %748 = vmatprep.mubr.f32.mxu0 0.0
    %749 = vmatmul.mubr.f32.gmra.mrb[0].mxu0 %v640
    %v750 = vpop.f32.mrb[0].mxu0
    %v751 = vadd.f32 %v662, %v750
    %v752 = vpop.f32.mrb[0].mxu0
    %753 = vdwg.mxu0
    %v754 = vand.u32 2147483647, %v731
    %vm755 = vcmp.le.f32.partialorder %v754, 0.7853982
    %vm756 = vcmp.lt.s32.totalorder %v731, 0
    %v757 = vand.u32 %v731, 2139095040
    %v758 = vshrl.u32 %v757, 23
    %v759 = vsub.s32 %v758, 127
    %v760 = vand.u32 2147483647, %v731
    %v761 = vand.u32 %v760, 8388607
    %v762 = vor.u32 %v761, 8388608
    %v763 = vsub.s32 0, %v762
    %v764 = vadd.s32 %v759, 1
    %vm765 = vcmp.gt.s32.totalorder %v764, 0
    %v766 = vsel %vm765, %v764, 0
    %v767 = vshrl.u32 %v766, 5
    %v768 = vand.u32 %v766, 31
    %v769 = vsub.s32 32, %v768
    %v770 = vshrl.u32 683565275, %v769
    %v771 = vshll.u32 683565275, %v768
    %v772 = vshrl.u32 2475754826, %v769
    %v773 = vor.u32 %v771, %v772
    %v774 = vshll.u32 2475754826, %v768
    %v775 = vshrl.u32 2131351028, %v769
    %v776 = vor.u32 %v774, %v775
    %v777 = vshll.u32 2131351028, %v768
    %v778 = vshrl.u32 2102212464, %v769
    %v779 = vor.u32 %v777, %v778
    %v780 = vshll.u32 2102212464, %v768
    %v781 = vshrl.u32 920167782, %v769
    %v782 = vor.u32 %v780, %v781
    %v783 = vshll.u32 920167782, %v768
    %v784 = vshrl.u32 1326507024, %v769
    %v785 = vor.u32 %v783, %v784
    %vm786 = vcmp.lt.s32.totalorder %v767, 1
    %vm787 = vcmp.lt.s32.totalorder %v767, 2
    %vm788 = vcmp.lt.s32.totalorder %v767, 3
    %vm789 = vcmp.lt.s32.totalorder %v767, 4
    %v790 = vsel %vm786, %v770, %v773
    %v791 = vsel %vm789, %v779, 2102212464
    %v792 = vsel %vm788, %v776, %v791
    %v793 = vsel %vm787, %v790, %v792
    %v794 = vsel %vm786, %v773, %v776
    %v795 = vsel %vm789, %v782, 920167782
    %v796 = vsel %vm788, %v779, %v795
    %v797 = vsel %vm787, %v794, %v796
    %v798 = vsel %vm786, %v776, %v779
    %v799 = vsel %vm789, %v785, 1326507024
    %v800 = vsel %vm788, %v782, %v799
    %v801 = vsel %vm787, %v798, %v800
    %v802 = vshll.u32 %v762, 8
    %v803 = vmul.u32.u64.compose %v802, %v801
    %v804 = vextract.low.u32 %v803
    %v805 = vextract.high.u32 %v803
    %v806 = vmul.u32.u64.compose %v802, %v797
    %v807 = vextract.low.u32 %v806
    %v808 = vextract.high.u32 %v806
    %v809 = vmul.u32 %v802, %v793
    %v810 = vadd.s32 %v805, %v807
    %vm811 = vc.u32 %v805, %v807
    %v812 = vadd.s32 %v808, 1
    %v813 = vsel %vm811, %v812, %v808
    %v814 = vadd.s32 %v809, %v813
    %v815 = vadd.s32 %v814, 536870912
    %v816 = vshrl.u32 %v815, 30
    %v817 = vshll.u32 %v816, 30
    %v818 = vsub.s32 %v814, %v817
    %vm819 = vcmp.lt.s32.totalorder %v818, 0
    %v820 = vsub.s32 0, %v818
    %v821 = vsel %vm819, %v820, %v818
    %v822 = vclz %v821
    %v823 = vsub.s32 %v822, 2
    %vm824 = vcmp.gt.s32.totalorder 0, %v823
    %v825 = vsel %vm824, 0, %v823
    %v826 = vsub.s32 32, %v825
    %v827 = vshll.u32 %v818, %v825
    %v828 = vshrl.u32 %v810, %v826
    %v829 = vor.u32 %v827, %v828
    %v830 = vsub.s32 4294967266, %v825
    %v831 = vadd.s32 %v830, 127
    %v832 = vshll.u32 %v831, 23
    %v833 = vor.u32 4788187, %v832
    %v834 = vand.u32 2147483647, %v833
    %v836 = vcvt.s32.f32 %v829
    %v837 = vmul.f32 %v836, %v834
    %v838 = vxor.u32 %v837, 2147483648
    %v839 = vsel %vm756, %v838, %v837
    %v840 = vsub.s32 4, %v816
    %v841 = vsel %vm756, %v840, %v816
    %v842 = vsel %vm755, %v731, %v839
    %v843 = vsel %vm755, 0, %v841
    %v844 = vcosq.f32.pop %v842
    %v845 = vsinq.f32.pop %v842
    %vm846 = vweird.f32 %v731
    %v847 = vadd.s32 %v843, 3
    %v848 = vand.u32 %v847, 3
    %vm849 = vcmp.lt.s32.totalorder %v848, 2
    %vm850 = vcmp.eq.s32.totalorder %v848, 0
    %v851 = vxor.u32 %v845, 2147483648
    %v852 = vsel %vm850, %v844, %v851
    %vm853 = vcmp.eq.s32.totalorder %v848, 2
    %v854 = vxor.u32 %v844, 2147483648
    %v855 = vsel %vm853, %v854, %v845
    %v856 = vsel %vm849, %v852, %v855
    %v857 = vsel %vm846, nan, %v856
    %v858 = vand.u32 2147483647, %v736
    %vm859 = vcmp.le.f32.partialorder %v858, 0.7853982
    %vm860 = vcmp.lt.s32.totalorder %v736, 0
    %v861 = vand.u32 %v736, 2139095040
    %v862 = vshrl.u32 %v861, 23
    %v863 = vsub.s32 %v862, 127
    %v864 = vand.u32 2147483647, %v736
    %v865 = vand.u32 %v864, 8388607
    %v866 = vor.u32 %v865, 8388608
    %v867 = vsub.s32 0, %v866
    %v868 = vadd.s32 %v863, 1
    %vm869 = vcmp.gt.s32.totalorder %v868, 0
    %v870 = vsel %vm869, %v868, 0
    %v871 = vshrl.u32 %v870, 5
    %v872 = vand.u32 %v870, 31
    %v873 = vsub.s32 32, %v872
    %v874 = vshrl.u32 683565275, %v873
    %v875 = vshll.u32 683565275, %v872
    %v876 = vshrl.u32 2475754826, %v873
    %v877 = vor.u32 %v875, %v876
    %v878 = vshll.u32 2475754826, %v872
    %v879 = vshrl.u32 2131351028, %v873
    %v880 = vor.u32 %v878, %v879
    %v881 = vshll.u32 2131351028, %v872
    %v882 = vshrl.u32 2102212464, %v873
    %v883 = vor.u32 %v881, %v882
    %v884 = vshll.u32 2102212464, %v872
    %v885 = vshrl.u32 920167782, %v873
    %v886 = vor.u32 %v884, %v885
    %v887 = vshll.u32 920167782, %v872
    %v888 = vshrl.u32 1326507024, %v873
    %v889 = vor.u32 %v887, %v888
    %vm890 = vcmp.lt.s32.totalorder %v871, 1
    %vm891 = vcmp.lt.s32.totalorder %v871, 2
    %vm892 = vcmp.lt.s32.totalorder %v871, 3
    %vm893 = vcmp.lt.s32.totalorder %v871, 4
    %v894 = vsel %vm890, %v874, %v877
    %v895 = vsel %vm893, %v883, 2102212464
    %v896 = vsel %vm892, %v880, %v895
    %v897 = vsel %vm891, %v894, %v896
    %v898 = vsel %vm890, %v877, %v880
    %v899 = vsel %vm893, %v886, 920167782
    %v900 = vsel %vm892, %v883, %v899
    %v901 = vsel %vm891, %v898, %v900
    %v902 = vsel %vm890, %v880, %v883
    %v903 = vsel %vm893, %v889, 1326507024
    %v904 = vsel %vm892, %v886, %v903
    %v905 = vsel %vm891, %v902, %v904
    %v906 = vshll.u32 %v866, 8
    %v907 = vmul.u32.u64.compose %v906, %v905
    %v908 = vextract.low.u32 %v907
    %v909 = vextract.high.u32 %v907
    %v910 = vmul.u32.u64.compose %v906, %v901
    %v911 = vextract.low.u32 %v910
    %v912 = vextract.high.u32 %v910
    %v913 = vmul.u32 %v906, %v897
    %v914 = vadd.s32 %v909, %v911
    %vm915 = vc.u32 %v909, %v911
    %v916 = vadd.s32 %v912, 1
    %v917 = vsel %vm915, %v916, %v912
    %v918 = vadd.s32 %v913, %v917
    %v919 = vadd.s32 %v918, 536870912
    %v920 = vshrl.u32 %v919, 30
    %v921 = vshll.u32 %v920, 30
    %v922 = vsub.s32 %v918, %v921
    %vm923 = vcmp.lt.s32.totalorder %v922, 0
    %v924 = vsub.s32 0, %v922
    %v925 = vsel %vm923, %v924, %v922
    %v926 = vclz %v925
    %v927 = vsub.s32 %v926, 2
    %vm928 = vcmp.gt.s32.totalorder 0, %v927
    %v929 = vsel %vm928, 0, %v927
    %v930 = vsub.s32 32, %v929
    %v931 = vshll.u32 %v922, %v929
    %v932 = vshrl.u32 %v914, %v930
    %v933 = vor.u32 %v931, %v932
    %v934 = vsub.s32 4294967266, %v929
    %v935 = vadd.s32 %v934, 127
    %v936 = vshll.u32 %v935, 23
    %v937 = vor.u32 4788187, %v936
    %v938 = vand.u32 2147483647, %v937
    %v940 = vcvt.s32.f32 %v933
    %v941 = vmul.f32 %v940, %v938
    %v942 = vxor.u32 %v941, 2147483648
    %v943 = vsel %vm860, %v942, %v941
    %v944 = vsub.s32 4, %v920
    %v945 = vsel %vm860, %v944, %v920
    %v946 = vsel %vm859, %v736, %v943
    %v947 = vsel %vm859, 0, %v945
    %v948 = vcosq.f32.pop %v946
    %v949 = vsinq.f32.pop %v946
    %vm950 = vweird.f32 %v736
    %v951 = vadd.s32 %v947, 3
    %v952 = vand.u32 %v951, 3
    %vm953 = vcmp.lt.s32.totalorder %v952, 2
    %vm954 = vcmp.eq.s32.totalorder %v952, 0
    %v955 = vxor.u32 %v949, 2147483648
    %v956 = vsel %vm954, %v948, %v955
    %vm957 = vcmp.eq.s32.totalorder %v952, 2
    %v958 = vxor.u32 %v948, 2147483648
    %v959 = vsel %vm957, %v958, %v949
    %v960 = vsel %vm953, %v956, %v959
    %v961 = vsel %vm950, nan, %v960
    %v962 = vand.u32 2147483647, %v741
    %vm963 = vcmp.le.f32.partialorder %v962, 0.7853982
    %vm964 = vcmp.lt.s32.totalorder %v741, 0
    %v965 = vand.u32 %v741, 2139095040
    %v966 = vshrl.u32 %v965, 23
    %v967 = vsub.s32 %v966, 127
    %v968 = vand.u32 2147483647, %v741
    %v969 = vand.u32 %v968, 8388607
    %v970 = vor.u32 %v969, 8388608
    %v971 = vsub.s32 0, %v970
    %v972 = vadd.s32 %v967, 1
    %vm973 = vcmp.gt.s32.totalorder %v972, 0
    %v974 = vsel %vm973, %v972, 0
    %v975 = vshrl.u32 %v974, 5
    %v976 = vand.u32 %v974, 31
    %v977 = vsub.s32 32, %v976
    %v978 = vshrl.u32 683565275, %v977
    %v979 = vshll.u32 683565275, %v976
    %v980 = vshrl.u32 2475754826, %v977
    %v981 = vor.u32 %v979, %v980
    %v982 = vshll.u32 2475754826, %v976
    %v983 = vshrl.u32 2131351028, %v977
    %v984 = vor.u32 %v982, %v983
    %v985 = vshll.u32 2131351028, %v976
    %v986 = vshrl.u32 2102212464, %v977
    %v987 = vor.u32 %v985, %v986
    %v988 = vshll.u32 2102212464, %v976
    %v989 = vshrl.u32 920167782, %v977
    %v990 = vor.u32 %v988, %v989
    %v991 = vshll.u32 920167782, %v976
    %v992 = vshrl.u32 1326507024, %v977
    %v993 = vor.u32 %v991, %v992
    %vm994 = vcmp.lt.s32.totalorder %v975, 1
    %vm995 = vcmp.lt.s32.totalorder %v975, 2
    %vm996 = vcmp.lt.s32.totalorder %v975, 3
    %vm997 = vcmp.lt.s32.totalorder %v975, 4
    %v998 = vsel %vm994, %v978, %v981
    %v999 = vsel %vm997, %v987, 2102212464
    %v1000 = vsel %vm996, %v984, %v999
    %v1001 = vsel %vm995, %v998, %v1000
    %v1002 = vsel %vm994, %v981, %v984
    %v1003 = vsel %vm997, %v990, 920167782
    %v1004 = vsel %vm996, %v987, %v1003
    %v1005 = vsel %vm995, %v1002, %v1004
    %v1006 = vsel %vm994, %v984, %v987
    %v1007 = vsel %vm997, %v993, 1326507024
    %v1008 = vsel %vm996, %v990, %v1007
    %v1009 = vsel %vm995, %v1006, %v1008
    %v1010 = vshll.u32 %v970, 8
    %v1011 = vmul.u32.u64.compose %v1010, %v1009
    %v1012 = vextract.low.u32 %v1011
    %v1013 = vextract.high.u32 %v1011
    %v1014 = vmul.u32.u64.compose %v1010, %v1005
    %v1015 = vextract.low.u32 %v1014
    %v1016 = vextract.high.u32 %v1014
    %v1017 = vmul.u32 %v1010, %v1001
    %v1018 = vadd.s32 %v1013, %v1015
    %vm1019 = vc.u32 %v1013, %v1015
    %v1020 = vadd.s32 %v1016, 1
    %v1021 = vsel %vm1019, %v1020, %v1016
    %v1022 = vadd.s32 %v1017, %v1021
    %v1023 = vadd.s32 %v1022, 536870912
    %v1024 = vshrl.u32 %v1023, 30
    %v1025 = vshll.u32 %v1024, 30
    %v1026 = vsub.s32 %v1022, %v1025
    %vm1027 = vcmp.lt.s32.totalorder %v1026, 0
    %v1028 = vsub.s32 0, %v1026
    %v1029 = vsel %vm1027, %v1028, %v1026
    %v1030 = vclz %v1029
    %v1031 = vsub.s32 %v1030, 2
    %vm1032 = vcmp.gt.s32.totalorder 0, %v1031
    %v1033 = vsel %vm1032, 0, %v1031
    %v1034 = vsub.s32 32, %v1033
    %v1035 = vshll.u32 %v1026, %v1033
    %v1036 = vshrl.u32 %v1018, %v1034
    %v1037 = vor.u32 %v1035, %v1036
    %v1038 = vsub.s32 4294967266, %v1033
    %v1039 = vadd.s32 %v1038, 127
    %v1040 = vshll.u32 %v1039, 23
    %v1041 = vor.u32 4788187, %v1040
    %v1042 = vand.u32 2147483647, %v1041
    %v1044 = vcvt.s32.f32 %v1037
    %v1045 = vmul.f32 %v1044, %v1042
    %v1046 = vxor.u32 %v1045, 2147483648
    %v1047 = vsel %vm964, %v1046, %v1045
    %v1048 = vsub.s32 4, %v1024
    %v1049 = vsel %vm964, %v1048, %v1024
    %v1050 = vsel %vm963, %v741, %v1047
    %v1051 = vsel %vm963, 0, %v1049
    %v1052 = vcosq.f32.pop %v1050
    %v1053 = vsinq.f32.pop %v1050
    %vm1054 = vweird.f32 %v741
    %v1055 = vadd.s32 %v1051, 3
    %v1056 = vand.u32 %v1055, 3
    %vm1057 = vcmp.lt.s32.totalorder %v1056, 2
    %vm1058 = vcmp.eq.s32.totalorder %v1056, 0
    %v1059 = vxor.u32 %v1053, 2147483648
    %v1060 = vsel %vm1058, %v1052, %v1059
    %vm1061 = vcmp.eq.s32.totalorder %v1056, 2
    %v1062 = vxor.u32 %v1052, 2147483648
    %v1063 = vsel %vm1061, %v1062, %v1053
    %v1064 = vsel %vm1057, %v1060, %v1063
    %v1065 = vsel %vm1054, nan, %v1064
    %v1066 = vand.u32 2147483647, %v746
    %vm1067 = vcmp.le.f32.partialorder %v1066, 0.7853982
    %vm1068 = vcmp.lt.s32.totalorder %v746, 0
    %v1069 = vand.u32 %v746, 2139095040
    %v1070 = vshrl.u32 %v1069, 23
    %v1071 = vsub.s32 %v1070, 127
    %v1072 = vand.u32 2147483647, %v746
    %v1073 = vand.u32 %v1072, 8388607
    %v1074 = vor.u32 %v1073, 8388608
    %v1075 = vsub.s32 0, %v1074
    %v1076 = vadd.s32 %v1071, 1
    %vm1077 = vcmp.gt.s32.totalorder %v1076, 0
    %v1078 = vsel %vm1077, %v1076, 0
    %v1079 = vshrl.u32 %v1078, 5
    %v1080 = vand.u32 %v1078, 31
    %v1081 = vsub.s32 32, %v1080
    %v1082 = vshrl.u32 683565275, %v1081
    %v1083 = vshll.u32 683565275, %v1080
    %v1084 = vshrl.u32 2475754826, %v1081
    %v1085 = vor.u32 %v1083, %v1084
    %v1086 = vshll.u32 2475754826, %v1080
    %v1087 = vshrl.u32 2131351028, %v1081
    %v1088 = vor.u32 %v1086, %v1087
    %v1089 = vshll.u32 2131351028, %v1080
    %v1090 = vshrl.u32 2102212464, %v1081
    %v1091 = vor.u32 %v1089, %v1090
    %v1092 = vshll.u32 2102212464, %v1080
    %v1093 = vshrl.u32 920167782, %v1081
    %v1094 = vor.u32 %v1092, %v1093
    %v1095 = vshll.u32 920167782, %v1080
    %v1096 = vshrl.u32 1326507024, %v1081
    %v1097 = vor.u32 %v1095, %v1096
    %vm1098 = vcmp.lt.s32.totalorder %v1079, 1
    %vm1099 = vcmp.lt.s32.totalorder %v1079, 2
    %vm1100 = vcmp.lt.s32.totalorder %v1079, 3
    %vm1101 = vcmp.lt.s32.totalorder %v1079, 4
    %v1102 = vsel %vm1098, %v1082, %v1085
    %v1103 = vsel %vm1101, %v1091, 2102212464
    %v1104 = vsel %vm1100, %v1088, %v1103
    %v1105 = vsel %vm1099, %v1102, %v1104
    %v1106 = vsel %vm1098, %v1085, %v1088
    %v1107 = vsel %vm1101, %v1094, 920167782
    %v1108 = vsel %vm1100, %v1091, %v1107
    %v1109 = vsel %vm1099, %v1106, %v1108
    %v1110 = vsel %vm1098, %v1088, %v1091
    %v1111 = vsel %vm1101, %v1097, 1326507024
    %v1112 = vsel %vm1100, %v1094, %v1111
    %v1113 = vsel %vm1099, %v1110, %v1112
    %v1114 = vshll.u32 %v1074, 8
    %v1115 = vmul.u32.u64.compose %v1114, %v1113
    %v1116 = vextract.low.u32 %v1115
    %v1117 = vextract.high.u32 %v1115
    %v1118 = vmul.u32.u64.compose %v1114, %v1109
    %v1119 = vextract.low.u32 %v1118
    %v1120 = vextract.high.u32 %v1118
    %v1121 = vmul.u32 %v1114, %v1105
    %v1122 = vadd.s32 %v1117, %v1119
    %vm1123 = vc.u32 %v1117, %v1119
    %v1124 = vadd.s32 %v1120, 1
    %v1125 = vsel %vm1123, %v1124, %v1120
    %v1126 = vadd.s32 %v1121, %v1125
    %v1127 = vadd.s32 %v1126, 536870912
    %v1128 = vshrl.u32 %v1127, 30
    %v1129 = vshll.u32 %v1128, 30
    %v1130 = vsub.s32 %v1126, %v1129
    %vm1131 = vcmp.lt.s32.totalorder %v1130, 0
    %v1132 = vsub.s32 0, %v1130
    %v1133 = vsel %vm1131, %v1132, %v1130
    %v1134 = vclz %v1133
    %v1135 = vsub.s32 %v1134, 2
    %vm1136 = vcmp.gt.s32.totalorder 0, %v1135
    %v1137 = vsel %vm1136, 0, %v1135
    %v1138 = vsub.s32 32, %v1137
    %v1139 = vshll.u32 %v1130, %v1137
    %v1140 = vshrl.u32 %v1122, %v1138
    %v1141 = vor.u32 %v1139, %v1140
    %v1142 = vsub.s32 4294967266, %v1137
    %v1143 = vadd.s32 %v1142, 127
    %v1144 = vshll.u32 %v1143, 23
    %v1145 = vor.u32 4788187, %v1144
    %v1146 = vand.u32 2147483647, %v1145
    %v1148 = vcvt.s32.f32 %v1141
    %v1149 = vmul.f32 %v1148, %v1146
    %v1150 = vxor.u32 %v1149, 2147483648
    %v1151 = vsel %vm1068, %v1150, %v1149
    %v1152 = vsub.s32 4, %v1128
    %v1153 = vsel %vm1068, %v1152, %v1128
    %v1154 = vsel %vm1067, %v746, %v1151
    %v1155 = vsel %vm1067, 0, %v1153
    %v1156 = vcosq.f32.pop %v1154
    %v1157 = vsinq.f32.pop %v1154
    %vm1158 = vweird.f32 %v746
    %v1159 = vadd.s32 %v1155, 3
    %v1160 = vand.u32 %v1159, 3
    %vm1161 = vcmp.lt.s32.totalorder %v1160, 2
    %vm1162 = vcmp.eq.s32.totalorder %v1160, 0
    %v1163 = vxor.u32 %v1157, 2147483648
    %v1164 = vsel %vm1162, %v1156, %v1163
    %vm1165 = vcmp.eq.s32.totalorder %v1160, 2
    %v1166 = vxor.u32 %v1156, 2147483648
    %v1167 = vsel %vm1165, %v1166, %v1157
    %v1168 = vsel %vm1161, %v1164, %v1167
    %v1169 = vsel %vm1158, nan, %v1168
    %v1170 = vand.u32 2147483647, %v751
    %vm1171 = vcmp.le.f32.partialorder %v1170, 0.7853982
    %vm1172 = vcmp.lt.s32.totalorder %v751, 0
    %v1173 = vand.u32 %v751, 2139095040
    %v1174 = vshrl.u32 %v1173, 23
    %v1175 = vsub.s32 %v1174, 127
    %v1176 = vand.u32 2147483647, %v751
    %v1177 = vand.u32 %v1176, 8388607
    %v1178 = vor.u32 %v1177, 8388608
    %v1179 = vsub.s32 0, %v1178
    %v1180 = vadd.s32 %v1175, 1
    %vm1181 = vcmp.gt.s32.totalorder %v1180, 0
    %v1182 = vsel %vm1181, %v1180, 0
    %v1183 = vshrl.u32 %v1182, 5
    %v1184 = vand.u32 %v1182, 31
    %v1185 = vsub.s32 32, %v1184
    %v1186 = vshrl.u32 683565275, %v1185
    %v1187 = vshll.u32 683565275, %v1184
    %v1188 = vshrl.u32 2475754826, %v1185
    %v1189 = vor.u32 %v1187, %v1188
    %v1190 = vshll.u32 2475754826, %v1184
    %v1191 = vshrl.u32 2131351028, %v1185
    %v1192 = vor.u32 %v1190, %v1191
    %v1193 = vshll.u32 2131351028, %v1184
    %v1194 = vshrl.u32 2102212464, %v1185
    %v1195 = vor.u32 %v1193, %v1194
    %v1196 = vshll.u32 2102212464, %v1184
    %v1197 = vshrl.u32 920167782, %v1185
    %v1198 = vor.u32 %v1196, %v1197
    %v1199 = vshll.u32 920167782, %v1184
    %v1200 = vshrl.u32 1326507024, %v1185
    %v1201 = vor.u32 %v1199, %v1200
    %vm1202 = vcmp.lt.s32.totalorder %v1183, 1
    %vm1203 = vcmp.lt.s32.totalorder %v1183, 2
    %vm1204 = vcmp.lt.s32.totalorder %v1183, 3
    %vm1205 = vcmp.lt.s32.totalorder %v1183, 4
    %v1206 = vsel %vm1202, %v1186, %v1189
    %v1207 = vsel %vm1205, %v1195, 2102212464
    %v1208 = vsel %vm1204, %v1192, %v1207
    %v1209 = vsel %vm1203, %v1206, %v1208
    %v1210 = vsel %vm1202, %v1189, %v1192
    %v1211 = vsel %vm1205, %v1198, 920167782
    %v1212 = vsel %vm1204, %v1195, %v1211
    %v1213 = vsel %vm1203, %v1210, %v1212
    %v1214 = vsel %vm1202, %v1192, %v1195
    %v1215 = vsel %vm1205, %v1201, 1326507024
    %v1216 = vsel %vm1204, %v1198, %v1215
    %v1217 = vsel %vm1203, %v1214, %v1216
    %v1218 = vshll.u32 %v1178, 8
    %v1219 = vmul.u32.u64.compose %v1218, %v1217
    %v1220 = vextract.low.u32 %v1219
    %v1221 = vextract.high.u32 %v1219
    %v1222 = vmul.u32.u64.compose %v1218, %v1213
    %v1223 = vextract.low.u32 %v1222
    %v1224 = vextract.high.u32 %v1222
    %v1225 = vmul.u32 %v1218, %v1209
    %v1226 = vadd.s32 %v1221, %v1223
    %vm1227 = vc.u32 %v1221, %v1223
    %v1228 = vadd.s32 %v1224, 1
    %v1229 = vsel %vm1227, %v1228, %v1224
    %v1230 = vadd.s32 %v1225, %v1229
    %v1231 = vadd.s32 %v1230, 536870912
    %v1232 = vshrl.u32 %v1231, 30
    %v1233 = vshll.u32 %v1232, 30
    %v1234 = vsub.s32 %v1230, %v1233
    %vm1235 = vcmp.lt.s32.totalorder %v1234, 0
    %v1236 = vsub.s32 0, %v1234
    %v1237 = vsel %vm1235, %v1236, %v1234
    %v1238 = vclz %v1237
    %v1239 = vsub.s32 %v1238, 2
    %vm1240 = vcmp.gt.s32.totalorder 0, %v1239
    %v1241 = vsel %vm1240, 0, %v1239
    %v1242 = vsub.s32 32, %v1241
    %v1243 = vshll.u32 %v1234, %v1241
    %v1244 = vshrl.u32 %v1226, %v1242
    %v1245 = vor.u32 %v1243, %v1244
    %v1246 = vsub.s32 4294967266, %v1241
    %v1247 = vadd.s32 %v1246, 127
    %v1248 = vshll.u32 %v1247, 23
    %v1249 = vor.u32 4788187, %v1248
    %v1250 = vand.u32 2147483647, %v1249
    %v1252 = vcvt.s32.f32 %v1245
    %v1253 = vmul.f32 %v1252, %v1250
    %v1254 = vxor.u32 %v1253, 2147483648
    %v1255 = vsel %vm1172, %v1254, %v1253
    %v1256 = vsub.s32 4, %v1232
    %v1257 = vsel %vm1172, %v1256, %v1232
    %v1258 = vsel %vm1171, %v751, %v1255
    %v1259 = vsel %vm1171, 0, %v1257
    %v1260 = vcosq.f32.pop %v1258
    %v1261 = vsinq.f32.pop %v1258
    %vm1262 = vweird.f32 %v751
    %v1263 = vadd.s32 %v1259, 3
    %v1264 = vand.u32 %v1263, 3
    %vm1265 = vcmp.lt.s32.totalorder %v1264, 2
    %vm1266 = vcmp.eq.s32.totalorder %v1264, 0
    %v1267 = vxor.u32 %v1261, 2147483648
    %v1268 = vsel %vm1266, %v1260, %v1267
    %vm1269 = vcmp.eq.s32.totalorder %v1264, 2
    %v1270 = vxor.u32 %v1260, 2147483648
    %v1271 = vsel %vm1269, %v1270, %v1261
    %v1272 = vsel %vm1265, %v1268, %v1271
    %v1273 = vsel %vm1262, nan, %v1272
    %s1274 = scalar_lea.vmem [#allocation2], 128
    %v1275 = vld [vmem:[%s1274] sm:$0xff]
    %v1276 = vld [vmem:[%s1274 + $0x8] sm:$0xff]
    %v1277 = vld [vmem:[%s1274 + $0x10] sm:$0xff]
    %v1278 = vld [vmem:[%s1274 + $0x18] sm:$0xff]
    %v1279 = vld [vmem:[%s1274 + $0x20] sm:$0xff]
    %v1280 = vld [vmem:[%s1274 + $0x28] sm:$0xff]
    %v1281 = vld [vmem:[%s1274 + $0x30] sm:$0xff]
    %v1282 = vld [vmem:[%s1274 + $0x38] sm:$0xff]
    %v1283 = vld [vmem:[%s1274 + $0x40] sm:$0xff]
    %v1284 = vld [vmem:[%s1274 + $0x48] sm:$0xff]
    %v1285 = vld [vmem:[%s1274 + $0x50] sm:$0xff]
    %v1286 = vld [vmem:[%s1274 + $0x58] sm:$0xff]
    %v1287 = vld [vmem:[%s1274 + $0x60] sm:$0xff]
    %v1288 = vld [vmem:[%s1274 + $0x68] sm:$0xff]
    %v1289 = vld [vmem:[%s1274 + $0x70] sm:$0xff]
    %v1290 = vld [vmem:[%s1274 + $0x78] sm:$0xff]
    %s1291 = scalar_lea.vmem %s4, 1
    %v1292 = vld [vmem:[%s1291] sm:$0x1]
    %v1294 = vlaneseq
    %v1295 = vshrl.u32 %v1294, 7
    %v1296 = vsub.s32 0, %v1295
    %v1297 = vrot.slane %v1292, %v1296
    %1299 = vmatprep.subr.mxu0 0.0
    %1300 = vmatpush1.msra.mxu0 %v1275
    %1301 = vmatprep.subr.mxu0 0.0
    %1302 = vmatpush1.msra.mxu0 %v1276
    %1303 = vmatprep.subr.mxu0 0.0
    %1304 = vmatpush1.msra.mxu0 %v1277
    %1305 = vmatprep.subr.mxu0 0.0
    %1306 = vmatpush1.msra.mxu0 %v1278
    %1307 = vmatprep.subr.mxu0 0.0
    %1308 = vmatpush1.msra.mxu0 %v1279
    %1309 = vmatprep.subr.mxu0 0.0
    %1310 = vmatpush1.msra.mxu0 %v1280
    %1311 = vmatprep.subr.mxu0 0.0
    %1312 = vmatpush1.msra.mxu0 %v1281
    %1313 = vmatprep.subr.mxu0 0.0
    %1314 = vmatpush1.msra.mxu0 %v1282
    %1315 = vmatprep.subr.mxu0 0.0
    %1316 = vmatpush1.msra.mxu0 %v1283
    %1317 = vmatprep.subr.mxu0 0.0
    %1318 = vmatpush1.msra.mxu0 %v1284
    %1319 = vmatprep.subr.mxu0 0.0
    %1320 = vmatpush1.msra.mxu0 %v1285
    %1321 = vmatprep.subr.mxu0 0.0
    %1322 = vmatpush1.msra.mxu0 %v1286
    %1323 = vmatprep.subr.mxu0 0.0
    %1324 = vmatpush1.msra.mxu0 %v1287
    %1325 = vmatprep.subr.mxu0 0.0
    %1326 = vmatpush1.msra.mxu0 %v1288
    %1327 = vmatprep.subr.mxu0 0.0
    %1328 = vmatpush1.msra.mxu0 %v1289
    %1329 = vmatprep.subr.mxu0 0.0
    %1330 = vmatpush1.msra.mxu0 %v1290
    %1331 = vmatprep.subr.mxu0 0.0
    %1332 = vmatpush1.msra.mxu0 0.0
    %1333 = vmatprep.subr.mxu0 0.0
    %1334 = vmatpush1.msra.mxu0 0.0
    %1335 = vmatprep.subr.mxu0 0.0
    %1336 = vmatpush1.msra.mxu0 0.0
    %1337 = vmatprep.subr.mxu0 0.0
    %1338 = vmatpush1.msra.mxu0 0.0
    %1339 = vmatprep.subr.mxu0 0.0
    %1340 = vmatpush1.msra.mxu0 0.0
    %1341 = vmatprep.subr.mxu0 0.0
    %1342 = vmatpush1.msra.mxu0 0.0
    %1343 = vmatprep.subr.mxu0 0.0
    %1344 = vmatpush1.msra.mxu0 0.0
    %1345 = vmatprep.subr.mxu0 0.0
    %1346 = vmatpush1.msra.mxu0 0.0
    %1347 = vmatprep.subr.mxu0 0.0
    %1348 = vmatpush1.msra.mxu0 0.0
    %1349 = vmatprep.subr.mxu0 0.0
    %1350 = vmatpush1.msra.mxu0 0.0
    %1351 = vmatprep.subr.mxu0 0.0
    %1352 = vmatpush1.msra.mxu0 0.0
    %1353 = vmatprep.subr.mxu0 0.0
    %1354 = vmatpush1.msra.mxu0 0.0
    %1355 = vmatprep.subr.mxu0 0.0
    %1356 = vmatpush1.msra.mxu0 0.0
    %1357 = vmatprep.subr.mxu0 0.0
    %1358 = vmatpush1.msra.mxu0 0.0
    %1359 = vmatprep.subr.mxu0 0.0
    %1360 = vmatpush1.msra.mxu0 0.0
    %1361 = vmatprep.subr.mxu0 0.0
    %1362 = vmatpush1.msra.mxu0 0.0
    %1363 = vmatprep.mubr.f32.mxu0 0.0
    %1364 = vmatmul.mubr.f32.gmra.mrb[0].mxu0 %v857
    %v1365 = vpop.f32.mrb[0].mxu0
    %v1366 = vadd.f32 %v1297, %v1365
    %v1367 = vpop.f32.mrb[0].mxu0
    %1368 = vmatprep.mubr.f32.mxu0 0.0
    %1369 = vmatmul.mubr.f32.gmra.mrb[0].mxu0 %v961
    %v1370 = vpop.f32.mrb[0].mxu0
    %v1371 = vadd.f32 %v1297, %v1370
    %v1372 = vpop.f32.mrb[0].mxu0
    %1373 = vmatprep.mubr.f32.mxu0 0.0
    %1374 = vmatmul.mubr.f32.gmra.mrb[0].mxu0 %v1065
    %v1375 = vpop.f32.mrb[0].mxu0
    %v1376 = vadd.f32 %v1297, %v1375
    %v1377 = vpop.f32.mrb[0].mxu0
    %1378 = vmatprep.mubr.f32.mxu0 0.0
    %1379 = vmatmul.mubr.f32.gmra.mrb[0].mxu0 %v1169
    %v1380 = vpop.f32.mrb[0].mxu0
    %v1381 = vadd.f32 %v1297, %v1380
    %v1382 = vpop.f32.mrb[0].mxu0
    %1383 = vmatprep.mubr.f32.mxu0 0.0
    %1384 = vmatmul.mubr.f32.gmra.mrb[0].mxu0 %v1273
    %v1385 = vpop.f32.mrb[0].mxu0
    %v1386 = vadd.f32 %v1297, %v1385
    %v1387 = vpop.f32.mrb[0].mxu0
    %1388 = vdwg.mxu0
    %v1389 = vand.u32 2147483647, %v1366
    %vm1390 = vcmp.le.f32.partialorder %v1389, 0.7853982
    %vm1391 = vcmp.lt.s32.totalorder %v1366, 0
    %v1392 = vand.u32 %v1366, 2139095040
    %v1393 = vshrl.u32 %v1392, 23
    %v1394 = vsub.s32 %v1393, 127
    %v1395 = vand.u32 2147483647, %v1366
    %v1396 = vand.u32 %v1395, 8388607
    %v1397 = vor.u32 %v1396, 8388608
    %v1398 = vsub.s32 0, %v1397
    %v1399 = vadd.s32 %v1394, 1
    %vm1400 = vcmp.gt.s32.totalorder %v1399, 0
    %v1401 = vsel %vm1400, %v1399, 0
    %v1402 = vshrl.u32 %v1401, 5
    %v1403 = vand.u32 %v1401, 31
    %v1404 = vsub.s32 32, %v1403
    %v1405 = vshrl.u32 683565275, %v1404
    %v1406 = vshll.u32 683565275, %v1403
    %v1407 = vshrl.u32 2475754826, %v1404
    %v1408 = vor.u32 %v1406, %v1407
    %v1409 = vshll.u32 2475754826, %v1403
    %v1410 = vshrl.u32 2131351028, %v1404
    %v1411 = vor.u32 %v1409, %v1410
    %v1412 = vshll.u32 2131351028, %v1403
    %v1413 = vshrl.u32 2102212464, %v1404
    %v1414 = vor.u32 %v1412, %v1413
    %v1415 = vshll.u32 2102212464, %v1403
    %v1416 = vshrl.u32 920167782, %v1404
    %v1417 = vor.u32 %v1415, %v1416
    %v1418 = vshll.u32 920167782, %v1403
    %v1419 = vshrl.u32 1326507024, %v1404
    %v1420 = vor.u32 %v1418, %v1419
    %vm1421 = vcmp.lt.s32.totalorder %v1402, 1
    %vm1422 = vcmp.lt.s32.totalorder %v1402, 2
    %vm1423 = vcmp.lt.s32.totalorder %v1402, 3
    %vm1424 = vcmp.lt.s32.totalorder %v1402, 4
    %v1425 = vsel %vm1421, %v1405, %v1408
    %v1426 = vsel %vm1424, %v1414, 2102212464
    %v1427 = vsel %vm1423, %v1411, %v1426
    %v1428 = vsel %vm1422, %v1425, %v1427
    %v1429 = vsel %vm1421, %v1408, %v1411
    %v1430 = vsel %vm1424, %v1417, 920167782
    %v1431 = vsel %vm1423, %v1414, %v1430
    %v1432 = vsel %vm1422, %v1429, %v1431
    %v1433 = vsel %vm1421, %v1411, %v1414
    %v1434 = vsel %vm1424, %v1420, 1326507024
    %v1435 = vsel %vm1423, %v1417, %v1434
    %v1436 = vsel %vm1422, %v1433, %v1435
    %v1437 = vshll.u32 %v1397, 8
    %v1438 = vmul.u32.u64.compose %v1437, %v1436
    %v1439 = vextract.low.u32 %v1438
    %v1440 = vextract.high.u32 %v1438
    %v1441 = vmul.u32.u64.compose %v1437, %v1432
    %v1442 = vextract.low.u32 %v1441
    %v1443 = vextract.high.u32 %v1441
    %v1444 = vmul.u32 %v1437, %v1428
    %v1445 = vadd.s32 %v1440, %v1442
    %vm1446 = vc.u32 %v1440, %v1442
    %v1447 = vadd.s32 %v1443, 1
    %v1448 = vsel %vm1446, %v1447, %v1443
    %v1449 = vadd.s32 %v1444, %v1448
    %v1450 = vadd.s32 %v1449, 536870912
    %v1451 = vshrl.u32 %v1450, 30
    %v1452 = vshll.u32 %v1451, 30
    %v1453 = vsub.s32 %v1449, %v1452
    %vm1454 = vcmp.lt.s32.totalorder %v1453, 0
    %v1455 = vsub.s32 0, %v1453
    %v1456 = vsel %vm1454, %v1455, %v1453
    %v1457 = vclz %v1456
    %v1458 = vsub.s32 %v1457, 2
    %vm1459 = vcmp.gt.s32.totalorder 0, %v1458
    %v1460 = vsel %vm1459, 0, %v1458
    %v1461 = vsub.s32 32, %v1460
    %v1462 = vshll.u32 %v1453, %v1460
    %v1463 = vshrl.u32 %v1445, %v1461
    %v1464 = vor.u32 %v1462, %v1463
    %v1465 = vsub.s32 4294967266, %v1460
    %v1466 = vadd.s32 %v1465, 127
    %v1467 = vshll.u32 %v1466, 23
    %v1468 = vor.u32 4788187, %v1467
    %v1469 = vand.u32 2147483647, %v1468
    %v1471 = vcvt.s32.f32 %v1464
    %v1472 = vmul.f32 %v1471, %v1469
    %v1473 = vxor.u32 %v1472, 2147483648
    %v1474 = vsel %vm1391, %v1473, %v1472
    %v1475 = vsub.s32 4, %v1451
    %v1476 = vsel %vm1391, %v1475, %v1451
    %v1477 = vsel %vm1390, %v1366, %v1474
    %v1478 = vsel %vm1390, 0, %v1476
    %v1479 = vcosq.f32.pop %v1477
    %v1480 = vsinq.f32.pop %v1477
    %vm1481 = vweird.f32 %v1366
    %v1482 = vadd.s32 %v1478, 3
    %v1483 = vand.u32 %v1482, 3
    %vm1484 = vcmp.lt.s32.totalorder %v1483, 2
    %vm1485 = vcmp.eq.s32.totalorder %v1483, 0
    %v1486 = vxor.u32 %v1480, 2147483648
    %v1487 = vsel %vm1485, %v1479, %v1486
    %vm1488 = vcmp.eq.s32.totalorder %v1483, 2
    %v1489 = vxor.u32 %v1479, 2147483648
    %v1490 = vsel %vm1488, %v1489, %v1480
    %v1491 = vsel %vm1484, %v1487, %v1490
    %v1492 = vsel %vm1481, nan, %v1491
    %v1493 = vand.u32 2147483647, %v1371
    %vm1494 = vcmp.le.f32.partialorder %v1493, 0.7853982
    %vm1495 = vcmp.lt.s32.totalorder %v1371, 0
    %v1496 = vand.u32 %v1371, 2139095040
    %v1497 = vshrl.u32 %v1496, 23
    %v1498 = vsub.s32 %v1497, 127
    %v1499 = vand.u32 2147483647, %v1371
    %v1500 = vand.u32 %v1499, 8388607
    %v1501 = vor.u32 %v1500, 8388608
    %v1502 = vsub.s32 0, %v1501
    %v1503 = vadd.s32 %v1498, 1
    %vm1504 = vcmp.gt.s32.totalorder %v1503, 0
    %v1505 = vsel %vm1504, %v1503, 0
    %v1506 = vshrl.u32 %v1505, 5
    %v1507 = vand.u32 %v1505, 31
    %v1508 = vsub.s32 32, %v1507
    %v1509 = vshrl.u32 683565275, %v1508
    %v1510 = vshll.u32 683565275, %v1507
    %v1511 = vshrl.u32 2475754826, %v1508
    %v1512 = vor.u32 %v1510, %v1511
    %v1513 = vshll.u32 2475754826, %v1507
    %v1514 = vshrl.u32 2131351028, %v1508
    %v1515 = vor.u32 %v1513, %v1514
    %v1516 = vshll.u32 2131351028, %v1507
    %v1517 = vshrl.u32 2102212464, %v1508
    %v1518 = vor.u32 %v1516, %v1517
    %v1519 = vshll.u32 2102212464, %v1507
    %v1520 = vshrl.u32 920167782, %v1508
    %v1521 = vor.u32 %v1519, %v1520
    %v1522 = vshll.u32 920167782, %v1507
    %v1523 = vshrl.u32 1326507024, %v1508
    %v1524 = vor.u32 %v1522, %v1523
    %vm1525 = vcmp.lt.s32.totalorder %v1506, 1
    %vm1526 = vcmp.lt.s32.totalorder %v1506, 2
    %vm1527 = vcmp.lt.s32.totalorder %v1506, 3
    %vm1528 = vcmp.lt.s32.totalorder %v1506, 4
    %v1529 = vsel %vm1525, %v1509, %v1512
    %v1530 = vsel %vm1528, %v1518, 2102212464
    %v1531 = vsel %vm1527, %v1515, %v1530
    %v1532 = vsel %vm1526, %v1529, %v1531
    %v1533 = vsel %vm1525, %v1512, %v1515
    %v1534 = vsel %vm1528, %v1521, 920167782
    %v1535 = vsel %vm1527, %v1518, %v1534
    %v1536 = vsel %vm1526, %v1533, %v1535
    %v1537 = vsel %vm1525, %v1515, %v1518
    %v1538 = vsel %vm1528, %v1524, 1326507024
    %v1539 = vsel %vm1527, %v1521, %v1538
    %v1540 = vsel %vm1526, %v1537, %v1539
    %v1541 = vshll.u32 %v1501, 8
    %v1542 = vmul.u32.u64.compose %v1541, %v1540
    %v1543 = vextract.low.u32 %v1542
    %v1544 = vextract.high.u32 %v1542
    %v1545 = vmul.u32.u64.compose %v1541, %v1536
    %v1546 = vextract.low.u32 %v1545
    %v1547 = vextract.high.u32 %v1545
    %v1548 = vmul.u32 %v1541, %v1532
    %v1549 = vadd.s32 %v1544, %v1546
    %vm1550 = vc.u32 %v1544, %v1546
    %v1551 = vadd.s32 %v1547, 1
    %v1552 = vsel %vm1550, %v1551, %v1547
    %v1553 = vadd.s32 %v1548, %v1552
    %v1554 = vadd.s32 %v1553, 536870912
    %v1555 = vshrl.u32 %v1554, 30
    %v1556 = vshll.u32 %v1555, 30
    %v1557 = vsub.s32 %v1553, %v1556
    %vm1558 = vcmp.lt.s32.totalorder %v1557, 0
    %v1559 = vsub.s32 0, %v1557
    %v1560 = vsel %vm1558, %v1559, %v1557
    %v1561 = vclz %v1560
    %v1562 = vsub.s32 %v1561, 2
    %vm1563 = vcmp.gt.s32.totalorder 0, %v1562
    %v1564 = vsel %vm1563, 0, %v1562
    %v1565 = vsub.s32 32, %v1564
    %v1566 = vshll.u32 %v1557, %v1564
    %v1567 = vshrl.u32 %v1549, %v1565
    %v1568 = vor.u32 %v1566, %v1567
    %v1569 = vsub.s32 4294967266, %v1564
    %v1570 = vadd.s32 %v1569, 127
    %v1571 = vshll.u32 %v1570, 23
    %v1572 = vor.u32 4788187, %v1571
    %v1573 = vand.u32 2147483647, %v1572
    %v1575 = vcvt.s32.f32 %v1568
    %v1576 = vmul.f32 %v1575, %v1573
    %v1577 = vxor.u32 %v1576, 2147483648
    %v1578 = vsel %vm1495, %v1577, %v1576
    %v1579 = vsub.s32 4, %v1555
    %v1580 = vsel %vm1495, %v1579, %v1555
    %v1581 = vsel %vm1494, %v1371, %v1578
    %v1582 = vsel %vm1494, 0, %v1580
    %v1583 = vcosq.f32.pop %v1581
    %v1584 = vsinq.f32.pop %v1581
    %vm1585 = vweird.f32 %v1371
    %v1586 = vadd.s32 %v1582, 3
    %v1587 = vand.u32 %v1586, 3
    %vm1588 = vcmp.lt.s32.totalorder %v1587, 2
    %vm1589 = vcmp.eq.s32.totalorder %v1587, 0
    %v1590 = vxor.u32 %v1584, 2147483648
    %v1591 = vsel %vm1589, %v1583, %v1590
    %vm1592 = vcmp.eq.s32.totalorder %v1587, 2
    %v1593 = vxor.u32 %v1583, 2147483648
    %v1594 = vsel %vm1592, %v1593, %v1584
    %v1595 = vsel %vm1588, %v1591, %v1594
    %v1596 = vsel %vm1585, nan, %v1595
    %v1597 = vand.u32 2147483647, %v1376
    %vm1598 = vcmp.le.f32.partialorder %v1597, 0.7853982
    %vm1599 = vcmp.lt.s32.totalorder %v1376, 0
    %v1600 = vand.u32 %v1376, 2139095040
    %v1601 = vshrl.u32 %v1600, 23
    %v1602 = vsub.s32 %v1601, 127
    %v1603 = vand.u32 2147483647, %v1376
    %v1604 = vand.u32 %v1603, 8388607
    %v1605 = vor.u32 %v1604, 8388608
    %v1606 = vsub.s32 0, %v1605
    %v1607 = vadd.s32 %v1602, 1
    %vm1608 = vcmp.gt.s32.totalorder %v1607, 0
    %v1609 = vsel %vm1608, %v1607, 0
    %v1610 = vshrl.u32 %v1609, 5
    %v1611 = vand.u32 %v1609, 31
    %v1612 = vsub.s32 32, %v1611
    %v1613 = vshrl.u32 683565275, %v1612
    %v1614 = vshll.u32 683565275, %v1611
    %v1615 = vshrl.u32 2475754826, %v1612
    %v1616 = vor.u32 %v1614, %v1615
    %v1617 = vshll.u32 2475754826, %v1611
    %v1618 = vshrl.u32 2131351028, %v1612
    %v1619 = vor.u32 %v1617, %v1618
    %v1620 = vshll.u32 2131351028, %v1611
    %v1621 = vshrl.u32 2102212464, %v1612
    %v1622 = vor.u32 %v1620, %v1621
    %v1623 = vshll.u32 2102212464, %v1611
    %v1624 = vshrl.u32 920167782, %v1612
    %v1625 = vor.u32 %v1623, %v1624
    %v1626 = vshll.u32 920167782, %v1611
    %v1627 = vshrl.u32 1326507024, %v1612
    %v1628 = vor.u32 %v1626, %v1627
    %vm1629 = vcmp.lt.s32.totalorder %v1610, 1
    %vm1630 = vcmp.lt.s32.totalorder %v1610, 2
    %vm1631 = vcmp.lt.s32.totalorder %v1610, 3
    %vm1632 = vcmp.lt.s32.totalorder %v1610, 4
    %v1633 = vsel %vm1629, %v1613, %v1616
    %v1634 = vsel %vm1632, %v1622, 2102212464
    %v1635 = vsel %vm1631, %v1619, %v1634
    %v1636 = vsel %vm1630, %v1633, %v1635
    %v1637 = vsel %vm1629, %v1616, %v1619
    %v1638 = vsel %vm1632, %v1625, 920167782
    %v1639 = vsel %vm1631, %v1622, %v1638
    %v1640 = vsel %vm1630, %v1637, %v1639
    %v1641 = vsel %vm1629, %v1619, %v1622
    %v1642 = vsel %vm1632, %v1628, 1326507024
    %v1643 = vsel %vm1631, %v1625, %v1642
    %v1644 = vsel %vm1630, %v1641, %v1643
    %v1645 = vshll.u32 %v1605, 8
    %v1646 = vmul.u32.u64.compose %v1645, %v1644
    %v1647 = vextract.low.u32 %v1646
    %v1648 = vextract.high.u32 %v1646
    %v1649 = vmul.u32.u64.compose %v1645, %v1640
    %v1650 = vextract.low.u32 %v1649
    %v1651 = vextract.high.u32 %v1649
    %v1652 = vmul.u32 %v1645, %v1636
    %v1653 = vadd.s32 %v1648, %v1650
    %vm1654 = vc.u32 %v1648, %v1650
    %v1655 = vadd.s32 %v1651, 1
    %v1656 = vsel %vm1654, %v1655, %v1651
    %v1657 = vadd.s32 %v1652, %v1656
    %v1658 = vadd.s32 %v1657, 536870912
    %v1659 = vshrl.u32 %v1658, 30
    %v1660 = vshll.u32 %v1659, 30
    %v1661 = vsub.s32 %v1657, %v1660
    %vm1662 = vcmp.lt.s32.totalorder %v1661, 0
    %v1663 = vsub.s32 0, %v1661
    %v1664 = vsel %vm1662, %v1663, %v1661
    %v1665 = vclz %v1664
    %v1666 = vsub.s32 %v1665, 2
    %vm1667 = vcmp.gt.s32.totalorder 0, %v1666
    %v1668 = vsel %vm1667, 0, %v1666
    %v1669 = vsub.s32 32, %v1668
    %v1670 = vshll.u32 %v1661, %v1668
    %v1671 = vshrl.u32 %v1653, %v1669
    %v1672 = vor.u32 %v1670, %v1671
    %v1673 = vsub.s32 4294967266, %v1668
    %v1674 = vadd.s32 %v1673, 127
    %v1675 = vshll.u32 %v1674, 23
    %v1676 = vor.u32 4788187, %v1675
    %v1677 = vand.u32 2147483647, %v1676
    %v1679 = vcvt.s32.f32 %v1672
    %v1680 = vmul.f32 %v1679, %v1677
    %v1681 = vxor.u32 %v1680, 2147483648
    %v1682 = vsel %vm1599, %v1681, %v1680
    %v1683 = vsub.s32 4, %v1659
    %v1684 = vsel %vm1599, %v1683, %v1659
    %v1685 = vsel %vm1598, %v1376, %v1682
    %v1686 = vsel %vm1598, 0, %v1684
    %v1687 = vcosq.f32.pop %v1685
    %v1688 = vsinq.f32.pop %v1685
    %vm1689 = vweird.f32 %v1376
    %v1690 = vadd.s32 %v1686, 3
    %v1691 = vand.u32 %v1690, 3
    %vm1692 = vcmp.lt.s32.totalorder %v1691, 2
    %vm1693 = vcmp.eq.s32.totalorder %v1691, 0
    %v1694 = vxor.u32 %v1688, 2147483648
    %v1695 = vsel %vm1693, %v1687, %v1694
    %vm1696 = vcmp.eq.s32.totalorder %v1691, 2
    %v1697 = vxor.u32 %v1687, 2147483648
    %v1698 = vsel %vm1696, %v1697, %v1688
    %v1699 = vsel %vm1692, %v1695, %v1698
    %v1700 = vsel %vm1689, nan, %v1699
    %v1701 = vand.u32 2147483647, %v1381
    %vm1702 = vcmp.le.f32.partialorder %v1701, 0.7853982
    %vm1703 = vcmp.lt.s32.totalorder %v1381, 0
    %v1704 = vand.u32 %v1381, 2139095040
    %v1705 = vshrl.u32 %v1704, 23
    %v1706 = vsub.s32 %v1705, 127
    %v1707 = vand.u32 2147483647, %v1381
    %v1708 = vand.u32 %v1707, 8388607
    %v1709 = vor.u32 %v1708, 8388608
    %v1710 = vsub.s32 0, %v1709
    %v1711 = vadd.s32 %v1706, 1
    %vm1712 = vcmp.gt.s32.totalorder %v1711, 0
    %v1713 = vsel %vm1712, %v1711, 0
    %v1714 = vshrl.u32 %v1713, 5
    %v1715 = vand.u32 %v1713, 31
    %v1716 = vsub.s32 32, %v1715
    %v1717 = vshrl.u32 683565275, %v1716
    %v1718 = vshll.u32 683565275, %v1715
    %v1719 = vshrl.u32 2475754826, %v1716
    %v1720 = vor.u32 %v1718, %v1719
    %v1721 = vshll.u32 2475754826, %v1715
    %v1722 = vshrl.u32 2131351028, %v1716
    %v1723 = vor.u32 %v1721, %v1722
    %v1724 = vshll.u32 2131351028, %v1715
    %v1725 = vshrl.u32 2102212464, %v1716
    %v1726 = vor.u32 %v1724, %v1725
    %v1727 = vshll.u32 2102212464, %v1715
    %v1728 = vshrl.u32 920167782, %v1716
    %v1729 = vor.u32 %v1727, %v1728
    %v1730 = vshll.u32 920167782, %v1715
    %v1731 = vshrl.u32 1326507024, %v1716
    %v1732 = vor.u32 %v1730, %v1731
    %vm1733 = vcmp.lt.s32.totalorder %v1714, 1
    %vm1734 = vcmp.lt.s32.totalorder %v1714, 2
    %vm1735 = vcmp.lt.s32.totalorder %v1714, 3
    %vm1736 = vcmp.lt.s32.totalorder %v1714, 4
    %v1737 = vsel %vm1733, %v1717, %v1720
    %v1738 = vsel %vm1736, %v1726, 2102212464
    %v1739 = vsel %vm1735, %v1723, %v1738
    %v1740 = vsel %vm1734, %v1737, %v1739
    %v1741 = vsel %vm1733, %v1720, %v1723
    %v1742 = vsel %vm1736, %v1729, 920167782
    %v1743 = vsel %vm1735, %v1726, %v1742
    %v1744 = vsel %vm1734, %v1741, %v1743
    %v1745 = vsel %vm1733, %v1723, %v1726
    %v1746 = vsel %vm1736, %v1732, 1326507024
    %v1747 = vsel %vm1735, %v1729, %v1746
    %v1748 = vsel %vm1734, %v1745, %v1747
    %v1749 = vshll.u32 %v1709, 8
    %v1750 = vmul.u32.u64.compose %v1749, %v1748
    %v1751 = vextract.low.u32 %v1750
    %v1752 = vextract.high.u32 %v1750
    %v1753 = vmul.u32.u64.compose %v1749, %v1744
    %v1754 = vextract.low.u32 %v1753
    %v1755 = vextract.high.u32 %v1753
    %v1756 = vmul.u32 %v1749, %v1740
    %v1757 = vadd.s32 %v1752, %v1754
    %vm1758 = vc.u32 %v1752, %v1754
    %v1759 = vadd.s32 %v1755, 1
    %v1760 = vsel %vm1758, %v1759, %v1755
    %v1761 = vadd.s32 %v1756, %v1760
    %v1762 = vadd.s32 %v1761, 536870912
    %v1763 = vshrl.u32 %v1762, 30
    %v1764 = vshll.u32 %v1763, 30
    %v1765 = vsub.s32 %v1761, %v1764
    %vm1766 = vcmp.lt.s32.totalorder %v1765, 0
    %v1767 = vsub.s32 0, %v1765
    %v1768 = vsel %vm1766, %v1767, %v1765
    %v1769 = vclz %v1768
    %v1770 = vsub.s32 %v1769, 2
    %vm1771 = vcmp.gt.s32.totalorder 0, %v1770
    %v1772 = vsel %vm1771, 0, %v1770
    %v1773 = vsub.s32 32, %v1772
    %v1774 = vshll.u32 %v1765, %v1772
    %v1775 = vshrl.u32 %v1757, %v1773
    %v1776 = vor.u32 %v1774, %v1775
    %v1777 = vsub.s32 4294967266, %v1772
    %v1778 = vadd.s32 %v1777, 127
    %v1779 = vshll.u32 %v1778, 23
    %v1780 = vor.u32 4788187, %v1779
    %v1781 = vand.u32 2147483647, %v1780
    %v1783 = vcvt.s32.f32 %v1776
    %v1784 = vmul.f32 %v1783, %v1781
    %v1785 = vxor.u32 %v1784, 2147483648
    %v1786 = vsel %vm1703, %v1785, %v1784
    %v1787 = vsub.s32 4, %v1763
    %v1788 = vsel %vm1703, %v1787, %v1763
    %v1789 = vsel %vm1702, %v1381, %v1786
    %v1790 = vsel %vm1702, 0, %v1788
    %v1791 = vcosq.f32.pop %v1789
    %v1792 = vsinq.f32.pop %v1789
    %vm1793 = vweird.f32 %v1381
    %v1794 = vadd.s32 %v1790, 3
    %v1795 = vand.u32 %v1794, 3
    %vm1796 = vcmp.lt.s32.totalorder %v1795, 2
    %vm1797 = vcmp.eq.s32.totalorder %v1795, 0
    %v1798 = vxor.u32 %v1792, 2147483648
    %v1799 = vsel %vm1797, %v1791, %v1798
    %vm1800 = vcmp.eq.s32.totalorder %v1795, 2
    %v1801 = vxor.u32 %v1791, 2147483648
    %v1802 = vsel %vm1800, %v1801, %v1792
    %v1803 = vsel %vm1796, %v1799, %v1802
    %v1804 = vsel %vm1793, nan, %v1803
    %v1805 = vand.u32 2147483647, %v1386
    %vm1806 = vcmp.le.f32.partialorder %v1805, 0.7853982
    %vm1807 = vcmp.lt.s32.totalorder %v1386, 0
    %v1808 = vand.u32 %v1386, 2139095040
    %v1809 = vshrl.u32 %v1808, 23
    %v1810 = vsub.s32 %v1809, 127
    %v1811 = vand.u32 2147483647, %v1386
    %v1812 = vand.u32 %v1811, 8388607
    %v1813 = vor.u32 %v1812, 8388608
    %v1814 = vsub.s32 0, %v1813
    %v1815 = vadd.s32 %v1810, 1
    %vm1816 = vcmp.gt.s32.totalorder %v1815, 0
    %v1817 = vsel %vm1816, %v1815, 0
    %v1818 = vshrl.u32 %v1817, 5
    %v1819 = vand.u32 %v1817, 31
    %v1820 = vsub.s32 32, %v1819
    %v1821 = vshrl.u32 683565275, %v1820
    %v1822 = vshll.u32 683565275, %v1819
    %v1823 = vshrl.u32 2475754826, %v1820
    %v1824 = vor.u32 %v1822, %v1823
    %v1825 = vshll.u32 2475754826, %v1819
    %v1826 = vshrl.u32 2131351028, %v1820
    %v1827 = vor.u32 %v1825, %v1826
    %v1828 = vshll.u32 2131351028, %v1819
    %v1829 = vshrl.u32 2102212464, %v1820
    %v1830 = vor.u32 %v1828, %v1829
    %v1831 = vshll.u32 2102212464, %v1819
    %v1832 = vshrl.u32 920167782, %v1820
    %v1833 = vor.u32 %v1831, %v1832
    %v1834 = vshll.u32 920167782, %v1819
    %v1835 = vshrl.u32 1326507024, %v1820
    %v1836 = vor.u32 %v1834, %v1835
    %vm1837 = vcmp.lt.s32.totalorder %v1818, 1
    %vm1838 = vcmp.lt.s32.totalorder %v1818, 2
    %vm1839 = vcmp.lt.s32.totalorder %v1818, 3
    %vm1840 = vcmp.lt.s32.totalorder %v1818, 4
    %v1841 = vsel %vm1837, %v1821, %v1824
    %v1842 = vsel %vm1840, %v1830, 2102212464
    %v1843 = vsel %vm1839, %v1827, %v1842
    %v1844 = vsel %vm1838, %v1841, %v1843
    %v1845 = vsel %vm1837, %v1824, %v1827
    %v1846 = vsel %vm1840, %v1833, 920167782
    %v1847 = vsel %vm1839, %v1830, %v1846
    %v1848 = vsel %vm1838, %v1845, %v1847
    %v1849 = vsel %vm1837, %v1827, %v1830
    %v1850 = vsel %vm1840, %v1836, 1326507024
    %v1851 = vsel %vm1839, %v1833, %v1850
    %v1852 = vsel %vm1838, %v1849, %v1851
    %v1853 = vshll.u32 %v1813, 8
    %v1854 = vmul.u32.u64.compose %v1853, %v1852
    %v1855 = vextract.low.u32 %v1854
    %v1856 = vextract.high.u32 %v1854
    %v1857 = vmul.u32.u64.compose %v1853, %v1848
    %v1858 = vextract.low.u32 %v1857
    %v1859 = vextract.high.u32 %v1857
    %v1860 = vmul.u32 %v1853, %v1844
    %v1861 = vadd.s32 %v1856, %v1858
    %vm1862 = vc.u32 %v1856, %v1858
    %v1863 = vadd.s32 %v1859, 1
    %v1864 = vsel %vm1862, %v1863, %v1859
    %v1865 = vadd.s32 %v1860, %v1864
    %v1866 = vadd.s32 %v1865, 536870912
    %v1867 = vshrl.u32 %v1866, 30
    %v1868 = vshll.u32 %v1867, 30
    %v1869 = vsub.s32 %v1865, %v1868
    %vm1870 = vcmp.lt.s32.totalorder %v1869, 0
    %v1871 = vsub.s32 0, %v1869
    %v1872 = vsel %vm1870, %v1871, %v1869
    %v1873 = vclz %v1872
    %v1874 = vsub.s32 %v1873, 2
    %vm1875 = vcmp.gt.s32.totalorder 0, %v1874
    %v1876 = vsel %vm1875, 0, %v1874
    %v1877 = vsub.s32 32, %v1876
    %v1878 = vshll.u32 %v1869, %v1876
    %v1879 = vshrl.u32 %v1861, %v1877
    %v1880 = vor.u32 %v1878, %v1879
    %v1881 = vsub.s32 4294967266, %v1876
    %v1882 = vadd.s32 %v1881, 127
    %v1883 = vshll.u32 %v1882, 23
    %v1884 = vor.u32 4788187, %v1883
    %v1885 = vand.u32 2147483647, %v1884
    %v1887 = vcvt.s32.f32 %v1880
    %v1888 = vmul.f32 %v1887, %v1885
    %v1889 = vxor.u32 %v1888, 2147483648
    %v1890 = vsel %vm1807, %v1889, %v1888
    %v1891 = vsub.s32 4, %v1867
    %v1892 = vsel %vm1807, %v1891, %v1867
    %v1893 = vsel %vm1806, %v1386, %v1890
    %v1894 = vsel %vm1806, 0, %v1892
    %v1895 = vcosq.f32.pop %v1893
    %v1896 = vsinq.f32.pop %v1893
    %vm1897 = vweird.f32 %v1386
    %v1898 = vadd.s32 %v1894, 3
    %v1899 = vand.u32 %v1898, 3
    %vm1900 = vcmp.lt.s32.totalorder %v1899, 2
    %vm1901 = vcmp.eq.s32.totalorder %v1899, 0
    %v1902 = vxor.u32 %v1896, 2147483648
    %v1903 = vsel %vm1901, %v1895, %v1902
    %vm1904 = vcmp.eq.s32.totalorder %v1899, 2
    %v1905 = vxor.u32 %v1895, 2147483648
    %v1906 = vsel %vm1904, %v1905, %v1896
    %v1907 = vsel %vm1900, %v1903, %v1906
    %v1908 = vsel %vm1897, nan, %v1907
    %s1909 = scalar_lea.vmem [#allocation2], 256
    %v1910 = vld [vmem:[%s1909] sm:$0xff]
    %v1911 = vld [vmem:[%s1909 + $0x8] sm:$0xff]
    %v1912 = vld [vmem:[%s1909 + $0x10] sm:$0xff]
    %v1913 = vld [vmem:[%s1909 + $0x18] sm:$0xff]
    %v1914 = vld [vmem:[%s1909 + $0x20] sm:$0xff]
    %v1915 = vld [vmem:[%s1909 + $0x28] sm:$0xff]
    %v1916 = vld [vmem:[%s1909 + $0x30] sm:$0xff]
    %v1917 = vld [vmem:[%s1909 + $0x38] sm:$0xff]
    %v1918 = vld [vmem:[%s1909 + $0x40] sm:$0xff]
    %v1919 = vld [vmem:[%s1909 + $0x48] sm:$0xff]
    %v1920 = vld [vmem:[%s1909 + $0x50] sm:$0xff]
    %v1921 = vld [vmem:[%s1909 + $0x58] sm:$0xff]
    %v1922 = vld [vmem:[%s1909 + $0x60] sm:$0xff]
    %v1923 = vld [vmem:[%s1909 + $0x68] sm:$0xff]
    %v1924 = vld [vmem:[%s1909 + $0x70] sm:$0xff]
    %v1925 = vld [vmem:[%s1909 + $0x78] sm:$0xff]
    %s1926 = scalar_lea.vmem %s4, 2
    %v1927 = vld [vmem:[%s1926] sm:$0x1]
    %v1929 = vlaneseq
    %v1930 = vshrl.u32 %v1929, 7
    %v1931 = vsub.s32 0, %v1930
    %v1932 = vrot.slane %v1927, %v1931
    %1934 = vmatprep.subr.mxu0 0.0
    %1935 = vmatpush1.msra.mxu0 %v1910
    %1936 = vmatprep.subr.mxu0 0.0
    %1937 = vmatpush1.msra.mxu0 %v1911
    %1938 = vmatprep.subr.mxu0 0.0
    %1939 = vmatpush1.msra.mxu0 %v1912
    %1940 = vmatprep.subr.mxu0 0.0
    %1941 = vmatpush1.msra.mxu0 %v1913
    %1942 = vmatprep.subr.mxu0 0.0
    %1943 = vmatpush1.msra.mxu0 %v1914
    %1944 = vmatprep.subr.mxu0 0.0
    %1945 = vmatpush1.msra.mxu0 %v1915
    %1946 = vmatprep.subr.mxu0 0.0
    %1947 = vmatpush1.msra.mxu0 %v1916
    %1948 = vmatprep.subr.mxu0 0.0
    %1949 = vmatpush1.msra.mxu0 %v1917
    %1950 = vmatprep.subr.mxu0 0.0
    %1951 = vmatpush1.msra.mxu0 %v1918
    %1952 = vmatprep.subr.mxu0 0.0
    %1953 = vmatpush1.msra.mxu0 %v1919
    %1954 = vmatprep.subr.mxu0 0.0
    %1955 = vmatpush1.msra.mxu0 %v1920
    %1956 = vmatprep.subr.mxu0 0.0
    %1957 = vmatpush1.msra.mxu0 %v1921
    %1958 = vmatprep.subr.mxu0 0.0
    %1959 = vmatpush1.msra.mxu0 %v1922
    %1960 = vmatprep.subr.mxu0 0.0
    %1961 = vmatpush1.msra.mxu0 %v1923
    %1962 = vmatprep.subr.mxu0 0.0
    %1963 = vmatpush1.msra.mxu0 %v1924
    %1964 = vmatprep.subr.mxu0 0.0
    %1965 = vmatpush1.msra.mxu0 %v1925
    %1966 = vmatprep.subr.mxu0 0.0
    %1967 = vmatpush1.msra.mxu0 0.0
    %1968 = vmatprep.subr.mxu0 0.0
    %1969 = vmatpush1.msra.mxu0 0.0
    %1970 = vmatprep.subr.mxu0 0.0
    %1971 = vmatpush1.msra.mxu0 0.0
    %1972 = vmatprep.subr.mxu0 0.0
    %1973 = vmatpush1.msra.mxu0 0.0
    %1974 = vmatprep.subr.mxu0 0.0
    %1975 = vmatpush1.msra.mxu0 0.0
    %1976 = vmatprep.subr.mxu0 0.0
    %1977 = vmatpush1.msra.mxu0 0.0
    %1978 = vmatprep.subr.mxu0 0.0
    %1979 = vmatpush1.msra.mxu0 0.0
    %1980 = vmatprep.subr.mxu0 0.0
    %1981 = vmatpush1.msra.mxu0 0.0
    %1982 = vmatprep.subr.mxu0 0.0
    %1983 = vmatpush1.msra.mxu0 0.0
    %1984 = vmatprep.subr.mxu0 0.0
    %1985 = vmatpush1.msra.mxu0 0.0
    %1986 = vmatprep.subr.mxu0 0.0
    %1987 = vmatpush1.msra.mxu0 0.0
    %1988 = vmatprep.subr.mxu0 0.0
    %1989 = vmatpush1.msra.mxu0 0.0
    %1990 = vmatprep.subr.mxu0 0.0
    %1991 = vmatpush1.msra.mxu0 0.0
    %1992 = vmatprep.subr.mxu0 0.0
    %1993 = vmatpush1.msra.mxu0 0.0
    %1994 = vmatprep.subr.mxu0 0.0
    %1995 = vmatpush1.msra.mxu0 0.0
    %1996 = vmatprep.subr.mxu0 0.0
    %1997 = vmatpush1.msra.mxu0 0.0
    %1998 = vmatprep.mubr.f32.mxu0 0.0
    %1999 = vmatmul.mubr.f32.gmra.mrb[0].mxu0 %v1492
    %v2000 = vpop.f32.mrb[0].mxu0
    %v2001 = vadd.f32 %v1932, %v2000
    %v2002 = vpop.f32.mrb[0].mxu0
    %2003 = vmatprep.mubr.f32.mxu0 0.0
    %2004 = vmatmul.mubr.f32.gmra.mrb[0].mxu0 %v1596
    %v2005 = vpop.f32.mrb[0].mxu0
    %v2006 = vadd.f32 %v1932, %v2005
    %v2007 = vpop.f32.mrb[0].mxu0
    %2008 = vmatprep.mubr.f32.mxu0 0.0
    %2009 = vmatmul.mubr.f32.gmra.mrb[0].mxu0 %v1700
    %v2010 = vpop.f32.mrb[0].mxu0
    %v2011 = vadd.f32 %v1932, %v2010
    %v2012 = vpop.f32.mrb[0].mxu0
    %2013 = vmatprep.mubr.f32.mxu0 0.0
    %2014 = vmatmul.mubr.f32.gmra.mrb[0].mxu0 %v1804
    %v2015 = vpop.f32.mrb[0].mxu0
    %v2016 = vadd.f32 %v1932, %v2015
    %v2017 = vpop.f32.mrb[0].mxu0
    %2018 = vmatprep.mubr.f32.mxu0 0.0
    %2019 = vmatmul.mubr.f32.gmra.mrb[0].mxu0 %v1908
    %v2020 = vpop.f32.mrb[0].mxu0
    %v2021 = vadd.f32 %v1932, %v2020
    %v2022 = vpop.f32.mrb[0].mxu0
    %2023 = vdwg.mxu0
    %v2024 = vand.u32 2147483647, %v2001
    %vm2025 = vcmp.le.f32.partialorder %v2024, 0.7853982
    %vm2026 = vcmp.lt.s32.totalorder %v2001, 0
    %v2027 = vand.u32 %v2001, 2139095040
    %v2028 = vshrl.u32 %v2027, 23
    %v2029 = vsub.s32 %v2028, 127
    %v2030 = vand.u32 2147483647, %v2001
    %v2031 = vand.u32 %v2030, 8388607
    %v2032 = vor.u32 %v2031, 8388608
    %v2033 = vsub.s32 0, %v2032
    %v2034 = vadd.s32 %v2029, 1
    %vm2035 = vcmp.gt.s32.totalorder %v2034, 0
    %v2036 = vsel %vm2035, %v2034, 0
    %v2037 = vshrl.u32 %v2036, 5
    %v2038 = vand.u32 %v2036, 31
    %v2039 = vsub.s32 32, %v2038
    %v2040 = vshrl.u32 683565275, %v2039
    %v2041 = vshll.u32 683565275, %v2038
    %v2042 = vshrl.u32 2475754826, %v2039
    %v2043 = vor.u32 %v2041, %v2042
    %v2044 = vshll.u32 2475754826, %v2038
    %v2045 = vshrl.u32 2131351028, %v2039
    %v2046 = vor.u32 %v2044, %v2045
    %v2047 = vshll.u32 2131351028, %v2038
    %v2048 = vshrl.u32 2102212464, %v2039
    %v2049 = vor.u32 %v2047, %v2048
    %v2050 = vshll.u32 2102212464, %v2038
    %v2051 = vshrl.u32 920167782, %v2039
    %v2052 = vor.u32 %v2050, %v2051
    %v2053 = vshll.u32 920167782, %v2038
    %v2054 = vshrl.u32 1326507024, %v2039
    %v2055 = vor.u32 %v2053, %v2054
    %vm2056 = vcmp.lt.s32.totalorder %v2037, 1
    %vm2057 = vcmp.lt.s32.totalorder %v2037, 2
    %vm2058 = vcmp.lt.s32.totalorder %v2037, 3
    %vm2059 = vcmp.lt.s32.totalorder %v2037, 4
    %v2060 = vsel %vm2056, %v2040, %v2043
    %v2061 = vsel %vm2059, %v2049, 2102212464
    %v2062 = vsel %vm2058, %v2046, %v2061
    %v2063 = vsel %vm2057, %v2060, %v2062
    %v2064 = vsel %vm2056, %v2043, %v2046
    %v2065 = vsel %vm2059, %v2052, 920167782
    %v2066 = vsel %vm2058, %v2049, %v2065
    %v2067 = vsel %vm2057, %v2064, %v2066
    %v2068 = vsel %vm2056, %v2046, %v2049
    %v2069 = vsel %vm2059, %v2055, 1326507024
    %v2070 = vsel %vm2058, %v2052, %v2069
    %v2071 = vsel %vm2057, %v2068, %v2070
    %v2072 = vshll.u32 %v2032, 8
    %v2073 = vmul.u32.u64.compose %v2072, %v2071
    %v2074 = vextract.low.u32 %v2073
    %v2075 = vextract.high.u32 %v2073
    %v2076 = vmul.u32.u64.compose %v2072, %v2067
    %v2077 = vextract.low.u32 %v2076
    %v2078 = vextract.high.u32 %v2076
    %v2079 = vmul.u32 %v2072, %v2063
    %v2080 = vadd.s32 %v2075, %v2077
    %vm2081 = vc.u32 %v2075, %v2077
    %v2082 = vadd.s32 %v2078, 1
    %v2083 = vsel %vm2081, %v2082, %v2078
    %v2084 = vadd.s32 %v2079, %v2083
    %v2085 = vadd.s32 %v2084, 536870912
    %v2086 = vshrl.u32 %v2085, 30
    %v2087 = vshll.u32 %v2086, 30
    %v2088 = vsub.s32 %v2084, %v2087
    %vm2089 = vcmp.lt.s32.totalorder %v2088, 0
    %v2090 = vsub.s32 0, %v2088
    %v2091 = vsel %vm2089, %v2090, %v2088
    %v2092 = vclz %v2091
    %v2093 = vsub.s32 %v2092, 2
    %vm2094 = vcmp.gt.s32.totalorder 0, %v2093
    %v2095 = vsel %vm2094, 0, %v2093
    %v2096 = vsub.s32 32, %v2095
    %v2097 = vshll.u32 %v2088, %v2095
    %v2098 = vshrl.u32 %v2080, %v2096
    %v2099 = vor.u32 %v2097, %v2098
    %v2100 = vsub.s32 4294967266, %v2095
    %v2101 = vadd.s32 %v2100, 127
    %v2102 = vshll.u32 %v2101, 23
    %v2103 = vor.u32 4788187, %v2102
    %v2104 = vand.u32 2147483647, %v2103
    %v2106 = vcvt.s32.f32 %v2099
    %v2107 = vmul.f32 %v2106, %v2104
    %v2108 = vxor.u32 %v2107, 2147483648
    %v2109 = vsel %vm2026, %v2108, %v2107
    %v2110 = vsub.s32 4, %v2086
    %v2111 = vsel %vm2026, %v2110, %v2086
    %v2112 = vsel %vm2025, %v2001, %v2109
    %v2113 = vsel %vm2025, 0, %v2111
    %v2114 = vcosq.f32.pop %v2112
    %v2115 = vsinq.f32.pop %v2112
    %vm2116 = vweird.f32 %v2001
    %v2117 = vadd.s32 %v2113, 3
    %v2118 = vand.u32 %v2117, 3
    %vm2119 = vcmp.lt.s32.totalorder %v2118, 2
    %vm2120 = vcmp.eq.s32.totalorder %v2118, 0
    %v2121 = vxor.u32 %v2115, 2147483648
    %v2122 = vsel %vm2120, %v2114, %v2121
    %vm2123 = vcmp.eq.s32.totalorder %v2118, 2
    %v2124 = vxor.u32 %v2114, 2147483648
    %v2125 = vsel %vm2123, %v2124, %v2115
    %v2126 = vsel %vm2119, %v2122, %v2125
    %v2127 = vsel %vm2116, nan, %v2126
    %v2128 = vand.u32 2147483647, %v2006
    %vm2129 = vcmp.le.f32.partialorder %v2128, 0.7853982
    %vm2130 = vcmp.lt.s32.totalorder %v2006, 0
    %v2131 = vand.u32 %v2006, 2139095040
    %v2132 = vshrl.u32 %v2131, 23
    %v2133 = vsub.s32 %v2132, 127
    %v2134 = vand.u32 2147483647, %v2006
    %v2135 = vand.u32 %v2134, 8388607
    %v2136 = vor.u32 %v2135, 8388608
    %v2137 = vsub.s32 0, %v2136
    %v2138 = vadd.s32 %v2133, 1
    %vm2139 = vcmp.gt.s32.totalorder %v2138, 0
    %v2140 = vsel %vm2139, %v2138, 0
    %v2141 = vshrl.u32 %v2140, 5
    %v2142 = vand.u32 %v2140, 31
    %v2143 = vsub.s32 32, %v2142
    %v2144 = vshrl.u32 683565275, %v2143
    %v2145 = vshll.u32 683565275, %v2142
    %v2146 = vshrl.u32 2475754826, %v2143
    %v2147 = vor.u32 %v2145, %v2146
    %v2148 = vshll.u32 2475754826, %v2142
    %v2149 = vshrl.u32 2131351028, %v2143
    %v2150 = vor.u32 %v2148, %v2149
    %v2151 = vshll.u32 2131351028, %v2142
    %v2152 = vshrl.u32 2102212464, %v2143
    %v2153 = vor.u32 %v2151, %v2152
    %v2154 = vshll.u32 2102212464, %v2142
    %v2155 = vshrl.u32 920167782, %v2143
    %v2156 = vor.u32 %v2154, %v2155
    %v2157 = vshll.u32 920167782, %v2142
    %v2158 = vshrl.u32 1326507024, %v2143
    %v2159 = vor.u32 %v2157, %v2158
    %vm2160 = vcmp.lt.s32.totalorder %v2141, 1
    %vm2161 = vcmp.lt.s32.totalorder %v2141, 2
    %vm2162 = vcmp.lt.s32.totalorder %v2141, 3
    %vm2163 = vcmp.lt.s32.totalorder %v2141, 4
    %v2164 = vsel %vm2160, %v2144, %v2147
    %v2165 = vsel %vm2163, %v2153, 2102212464
    %v2166 = vsel %vm2162, %v2150, %v2165
    %v2167 = vsel %vm2161, %v2164, %v2166
    %v2168 = vsel %vm2160, %v2147, %v2150
    %v2169 = vsel %vm2163, %v2156, 920167782
    %v2170 = vsel %vm2162, %v2153, %v2169
    %v2171 = vsel %vm2161, %v2168, %v2170
    %v2172 = vsel %vm2160, %v2150, %v2153
    %v2173 = vsel %vm2163, %v2159, 1326507024
    %v2174 = vsel %vm2162, %v2156, %v2173
    %v2175 = vsel %vm2161, %v2172, %v2174
    %v2176 = vshll.u32 %v2136, 8
    %v2177 = vmul.u32.u64.compose %v2176, %v2175
    %v2178 = vextract.low.u32 %v2177
    %v2179 = vextract.high.u32 %v2177
    %v2180 = vmul.u32.u64.compose %v2176, %v2171
    %v2181 = vextract.low.u32 %v2180
    %v2182 = vextract.high.u32 %v2180
    %v2183 = vmul.u32 %v2176, %v2167
    %v2184 = vadd.s32 %v2179, %v2181
    %vm2185 = vc.u32 %v2179, %v2181
    %v2186 = vadd.s32 %v2182, 1
    %v2187 = vsel %vm2185, %v2186, %v2182
    %v2188 = vadd.s32 %v2183, %v2187
    %v2189 = vadd.s32 %v2188, 536870912
    %v2190 = vshrl.u32 %v2189, 30
    %v2191 = vshll.u32 %v2190, 30
    %v2192 = vsub.s32 %v2188, %v2191
    %vm2193 = vcmp.lt.s32.totalorder %v2192, 0
    %v2194 = vsub.s32 0, %v2192
    %v2195 = vsel %vm2193, %v2194, %v2192
    %v2196 = vclz %v2195
    %v2197 = vsub.s32 %v2196, 2
    %vm2198 = vcmp.gt.s32.totalorder 0, %v2197
    %v2199 = vsel %vm2198, 0, %v2197
    %v2200 = vsub.s32 32, %v2199
    %v2201 = vshll.u32 %v2192, %v2199
    %v2202 = vshrl.u32 %v2184, %v2200
    %v2203 = vor.u32 %v2201, %v2202
    %v2204 = vsub.s32 4294967266, %v2199
    %v2205 = vadd.s32 %v2204, 127
    %v2206 = vshll.u32 %v2205, 23
    %v2207 = vor.u32 4788187, %v2206
    %v2208 = vand.u32 2147483647, %v2207
    %v2210 = vcvt.s32.f32 %v2203
    %v2211 = vmul.f32 %v2210, %v2208
    %v2212 = vxor.u32 %v2211, 2147483648
    %v2213 = vsel %vm2130, %v2212, %v2211
    %v2214 = vsub.s32 4, %v2190
    %v2215 = vsel %vm2130, %v2214, %v2190
    %v2216 = vsel %vm2129, %v2006, %v2213
    %v2217 = vsel %vm2129, 0, %v2215
    %v2218 = vcosq.f32.pop %v2216
    %v2219 = vsinq.f32.pop %v2216
    %vm2220 = vweird.f32 %v2006
    %v2221 = vadd.s32 %v2217, 3
    %v2222 = vand.u32 %v2221, 3
    %vm2223 = vcmp.lt.s32.totalorder %v2222, 2
    %vm2224 = vcmp.eq.s32.totalorder %v2222, 0
    %v2225 = vxor.u32 %v2219, 2147483648
    %v2226 = vsel %vm2224, %v2218, %v2225
    %vm2227 = vcmp.eq.s32.totalorder %v2222, 2
    %v2228 = vxor.u32 %v2218, 2147483648
    %v2229 = vsel %vm2227, %v2228, %v2219
    %v2230 = vsel %vm2223, %v2226, %v2229
    %v2231 = vsel %vm2220, nan, %v2230
    %v2232 = vand.u32 2147483647, %v2011
    %vm2233 = vcmp.le.f32.partialorder %v2232, 0.7853982
    %vm2234 = vcmp.lt.s32.totalorder %v2011, 0
    %v2235 = vand.u32 %v2011, 2139095040
    %v2236 = vshrl.u32 %v2235, 23
    %v2237 = vsub.s32 %v2236, 127
    %v2238 = vand.u32 2147483647, %v2011
    %v2239 = vand.u32 %v2238, 8388607
    %v2240 = vor.u32 %v2239, 8388608
    %v2241 = vsub.s32 0, %v2240
    %v2242 = vadd.s32 %v2237, 1
    %vm2243 = vcmp.gt.s32.totalorder %v2242, 0
    %v2244 = vsel %vm2243, %v2242, 0
    %v2245 = vshrl.u32 %v2244, 5
    %v2246 = vand.u32 %v2244, 31
    %v2247 = vsub.s32 32, %v2246
    %v2248 = vshrl.u32 683565275, %v2247
    %v2249 = vshll.u32 683565275, %v2246
    %v2250 = vshrl.u32 2475754826, %v2247
    %v2251 = vor.u32 %v2249, %v2250
    %v2252 = vshll.u32 2475754826, %v2246
    %v2253 = vshrl.u32 2131351028, %v2247
    %v2254 = vor.u32 %v2252, %v2253
    %v2255 = vshll.u32 2131351028, %v2246
    %v2256 = vshrl.u32 2102212464, %v2247
    %v2257 = vor.u32 %v2255, %v2256
    %v2258 = vshll.u32 2102212464, %v2246
    %v2259 = vshrl.u32 920167782, %v2247
    %v2260 = vor.u32 %v2258, %v2259
    %v2261 = vshll.u32 920167782, %v2246
    %v2262 = vshrl.u32 1326507024, %v2247
    %v2263 = vor.u32 %v2261, %v2262
    %vm2264 = vcmp.lt.s32.totalorder %v2245, 1
    %vm2265 = vcmp.lt.s32.totalorder %v2245, 2
    %vm2266 = vcmp.lt.s32.totalorder %v2245, 3
    %vm2267 = vcmp.lt.s32.totalorder %v2245, 4
    %v2268 = vsel %vm2264, %v2248, %v2251
    %v2269 = vsel %vm2267, %v2257, 2102212464
    %v2270 = vsel %vm2266, %v2254, %v2269
    %v2271 = vsel %vm2265, %v2268, %v2270
    %v2272 = vsel %vm2264, %v2251, %v2254
    %v2273 = vsel %vm2267, %v2260, 920167782
    %v2274 = vsel %vm2266, %v2257, %v2273
    %v2275 = vsel %vm2265, %v2272, %v2274
    %v2276 = vsel %vm2264, %v2254, %v2257
    %v2277 = vsel %vm2267, %v2263, 1326507024
    %v2278 = vsel %vm2266, %v2260, %v2277
    %v2279 = vsel %vm2265, %v2276, %v2278
    %v2280 = vshll.u32 %v2240, 8
    %v2281 = vmul.u32.u64.compose %v2280, %v2279
    %v2282 = vextract.low.u32 %v2281
    %v2283 = vextract.high.u32 %v2281
    %v2284 = vmul.u32.u64.compose %v2280, %v2275
    %v2285 = vextract.low.u32 %v2284
    %v2286 = vextract.high.u32 %v2284
    %v2287 = vmul.u32 %v2280, %v2271
    %v2288 = vadd.s32 %v2283, %v2285
    %vm2289 = vc.u32 %v2283, %v2285
    %v2290 = vadd.s32 %v2286, 1
    %v2291 = vsel %vm2289, %v2290, %v2286
    %v2292 = vadd.s32 %v2287, %v2291
    %v2293 = vadd.s32 %v2292, 536870912
    %v2294 = vshrl.u32 %v2293, 30
    %v2295 = vshll.u32 %v2294, 30
    %v2296 = vsub.s32 %v2292, %v2295
    %vm2297 = vcmp.lt.s32.totalorder %v2296, 0
    %v2298 = vsub.s32 0, %v2296
    %v2299 = vsel %vm2297, %v2298, %v2296
    %v2300 = vclz %v2299
    %v2301 = vsub.s32 %v2300, 2
    %vm2302 = vcmp.gt.s32.totalorder 0, %v2301
    %v2303 = vsel %vm2302, 0, %v2301
    %v2304 = vsub.s32 32, %v2303
    %v2305 = vshll.u32 %v2296, %v2303
    %v2306 = vshrl.u32 %v2288, %v2304
    %v2307 = vor.u32 %v2305, %v2306
    %v2308 = vsub.s32 4294967266, %v2303
    %v2309 = vadd.s32 %v2308, 127
    %v2310 = vshll.u32 %v2309, 23
    %v2311 = vor.u32 4788187, %v2310
    %v2312 = vand.u32 2147483647, %v2311
    %v2314 = vcvt.s32.f32 %v2307
    %v2315 = vmul.f32 %v2314, %v2312
    %v2316 = vxor.u32 %v2315, 2147483648
    %v2317 = vsel %vm2234, %v2316, %v2315
    %v2318 = vsub.s32 4, %v2294
    %v2319 = vsel %vm2234, %v2318, %v2294
    %v2320 = vsel %vm2233, %v2011, %v2317
    %v2321 = vsel %vm2233, 0, %v2319
    %v2322 = vcosq.f32.pop %v2320
    %v2323 = vsinq.f32.pop %v2320
    %vm2324 = vweird.f32 %v2011
    %v2325 = vadd.s32 %v2321, 3
    %v2326 = vand.u32 %v2325, 3
    %vm2327 = vcmp.lt.s32.totalorder %v2326, 2
    %vm2328 = vcmp.eq.s32.totalorder %v2326, 0
    %v2329 = vxor.u32 %v2323, 2147483648
    %v2330 = vsel %vm2328, %v2322, %v2329
    %vm2331 = vcmp.eq.s32.totalorder %v2326, 2
    %v2332 = vxor.u32 %v2322, 2147483648
    %v2333 = vsel %vm2331, %v2332, %v2323
    %v2334 = vsel %vm2327, %v2330, %v2333
    %v2335 = vsel %vm2324, nan, %v2334
    %v2336 = vand.u32 2147483647, %v2016
    %vm2337 = vcmp.le.f32.partialorder %v2336, 0.7853982
    %vm2338 = vcmp.lt.s32.totalorder %v2016, 0
    %v2339 = vand.u32 %v2016, 2139095040
    %v2340 = vshrl.u32 %v2339, 23
    %v2341 = vsub.s32 %v2340, 127
    %v2342 = vand.u32 2147483647, %v2016
    %v2343 = vand.u32 %v2342, 8388607
    %v2344 = vor.u32 %v2343, 8388608
    %v2345 = vsub.s32 0, %v2344
    %v2346 = vadd.s32 %v2341, 1
    %vm2347 = vcmp.gt.s32.totalorder %v2346, 0
    %v2348 = vsel %vm2347, %v2346, 0
    %v2349 = vshrl.u32 %v2348, 5
    %v2350 = vand.u32 %v2348, 31
    %v2351 = vsub.s32 32, %v2350
    %v2352 = vshrl.u32 683565275, %v2351
    %v2353 = vshll.u32 683565275, %v2350
    %v2354 = vshrl.u32 2475754826, %v2351
    %v2355 = vor.u32 %v2353, %v2354
    %v2356 = vshll.u32 2475754826, %v2350
    %v2357 = vshrl.u32 2131351028, %v2351
    %v2358 = vor.u32 %v2356, %v2357
    %v2359 = vshll.u32 2131351028, %v2350
    %v2360 = vshrl.u32 2102212464, %v2351
    %v2361 = vor.u32 %v2359, %v2360
    %v2362 = vshll.u32 2102212464, %v2350
    %v2363 = vshrl.u32 920167782, %v2351
    %v2364 = vor.u32 %v2362, %v2363
    %v2365 = vshll.u32 920167782, %v2350
    %v2366 = vshrl.u32 1326507024, %v2351
    %v2367 = vor.u32 %v2365, %v2366
    %vm2368 = vcmp.lt.s32.totalorder %v2349, 1
    %vm2369 = vcmp.lt.s32.totalorder %v2349, 2
    %vm2370 = vcmp.lt.s32.totalorder %v2349, 3
    %vm2371 = vcmp.lt.s32.totalorder %v2349, 4
    %v2372 = vsel %vm2368, %v2352, %v2355
    %v2373 = vsel %vm2371, %v2361, 2102212464
    %v2374 = vsel %vm2370, %v2358, %v2373
    %v2375 = vsel %vm2369, %v2372, %v2374
    %v2376 = vsel %vm2368, %v2355, %v2358
    %v2377 = vsel %vm2371, %v2364, 920167782
    %v2378 = vsel %vm2370, %v2361, %v2377
    %v2379 = vsel %vm2369, %v2376, %v2378
    %v2380 = vsel %vm2368, %v2358, %v2361
    %v2381 = vsel %vm2371, %v2367, 1326507024
    %v2382 = vsel %vm2370, %v2364, %v2381
    %v2383 = vsel %vm2369, %v2380, %v2382
    %v2384 = vshll.u32 %v2344, 8
    %v2385 = vmul.u32.u64.compose %v2384, %v2383
    %v2386 = vextract.low.u32 %v2385
    %v2387 = vextract.high.u32 %v2385
    %v2388 = vmul.u32.u64.compose %v2384, %v2379
    %v2389 = vextract.low.u32 %v2388
    %v2390 = vextract.high.u32 %v2388
    %v2391 = vmul.u32 %v2384, %v2375
    %v2392 = vadd.s32 %v2387, %v2389
    %vm2393 = vc.u32 %v2387, %v2389
    %v2394 = vadd.s32 %v2390, 1
    %v2395 = vsel %vm2393, %v2394, %v2390
    %v2396 = vadd.s32 %v2391, %v2395
    %v2397 = vadd.s32 %v2396, 536870912
    %v2398 = vshrl.u32 %v2397, 30
    %v2399 = vshll.u32 %v2398, 30
    %v2400 = vsub.s32 %v2396, %v2399
    %vm2401 = vcmp.lt.s32.totalorder %v2400, 0
    %v2402 = vsub.s32 0, %v2400
    %v2403 = vsel %vm2401, %v2402, %v2400
    %v2404 = vclz %v2403
    %v2405 = vsub.s32 %v2404, 2
    %vm2406 = vcmp.gt.s32.totalorder 0, %v2405
    %v2407 = vsel %vm2406, 0, %v2405
    %v2408 = vsub.s32 32, %v2407
    %v2409 = vshll.u32 %v2400, %v2407
    %v2410 = vshrl.u32 %v2392, %v2408
    %v2411 = vor.u32 %v2409, %v2410
    %v2412 = vsub.s32 4294967266, %v2407
    %v2413 = vadd.s32 %v2412, 127
    %v2414 = vshll.u32 %v2413, 23
    %v2415 = vor.u32 4788187, %v2414
    %v2416 = vand.u32 2147483647, %v2415
    %v2418 = vcvt.s32.f32 %v2411
    %v2419 = vmul.f32 %v2418, %v2416
    %v2420 = vxor.u32 %v2419, 2147483648
    %v2421 = vsel %vm2338, %v2420, %v2419
    %v2422 = vsub.s32 4, %v2398
    %v2423 = vsel %vm2338, %v2422, %v2398
    %v2424 = vsel %vm2337, %v2016, %v2421
    %v2425 = vsel %vm2337, 0, %v2423
    %v2426 = vcosq.f32.pop %v2424
    %v2427 = vsinq.f32.pop %v2424
    %vm2428 = vweird.f32 %v2016
    %v2429 = vadd.s32 %v2425, 3
    %v2430 = vand.u32 %v2429, 3
    %vm2431 = vcmp.lt.s32.totalorder %v2430, 2
    %vm2432 = vcmp.eq.s32.totalorder %v2430, 0
    %v2433 = vxor.u32 %v2427, 2147483648
    %v2434 = vsel %vm2432, %v2426, %v2433
    %vm2435 = vcmp.eq.s32.totalorder %v2430, 2
    %v2436 = vxor.u32 %v2426, 2147483648
    %v2437 = vsel %vm2435, %v2436, %v2427
    %v2438 = vsel %vm2431, %v2434, %v2437
    %v2439 = vsel %vm2428, nan, %v2438
    %v2440 = vand.u32 2147483647, %v2021
    %vm2441 = vcmp.le.f32.partialorder %v2440, 0.7853982
    %vm2442 = vcmp.lt.s32.totalorder %v2021, 0
    %v2443 = vand.u32 %v2021, 2139095040
    %v2444 = vshrl.u32 %v2443, 23
    %v2445 = vsub.s32 %v2444, 127
    %v2446 = vand.u32 2147483647, %v2021
    %v2447 = vand.u32 %v2446, 8388607
    %v2448 = vor.u32 %v2447, 8388608
    %v2449 = vsub.s32 0, %v2448
    %v2450 = vadd.s32 %v2445, 1
    %vm2451 = vcmp.gt.s32.totalorder %v2450, 0
    %v2452 = vsel %vm2451, %v2450, 0
    %v2453 = vshrl.u32 %v2452, 5
    %v2454 = vand.u32 %v2452, 31
    %v2455 = vsub.s32 32, %v2454
    %v2456 = vshrl.u32 683565275, %v2455
    %v2457 = vshll.u32 683565275, %v2454
    %v2458 = vshrl.u32 2475754826, %v2455
    %v2459 = vor.u32 %v2457, %v2458
    %v2460 = vshll.u32 2475754826, %v2454
    %v2461 = vshrl.u32 2131351028, %v2455
    %v2462 = vor.u32 %v2460, %v2461
    %v2463 = vshll.u32 2131351028, %v2454
    %v2464 = vshrl.u32 2102212464, %v2455
    %v2465 = vor.u32 %v2463, %v2464
    %v2466 = vshll.u32 2102212464, %v2454
    %v2467 = vshrl.u32 920167782, %v2455
    %v2468 = vor.u32 %v2466, %v2467
    %v2469 = vshll.u32 920167782, %v2454
    %v2470 = vshrl.u32 1326507024, %v2455
    %v2471 = vor.u32 %v2469, %v2470
    %vm2472 = vcmp.lt.s32.totalorder %v2453, 1
    %vm2473 = vcmp.lt.s32.totalorder %v2453, 2
    %vm2474 = vcmp.lt.s32.totalorder %v2453, 3
    %vm2475 = vcmp.lt.s32.totalorder %v2453, 4
    %v2476 = vsel %vm2472, %v2456, %v2459
    %v2477 = vsel %vm2475, %v2465, 2102212464
    %v2478 = vsel %vm2474, %v2462, %v2477
    %v2479 = vsel %vm2473, %v2476, %v2478
    %v2480 = vsel %vm2472, %v2459, %v2462
    %v2481 = vsel %vm2475, %v2468, 920167782
    %v2482 = vsel %vm2474, %v2465, %v2481
    %v2483 = vsel %vm2473, %v2480, %v2482
    %v2484 = vsel %vm2472, %v2462, %v2465
    %v2485 = vsel %vm2475, %v2471, 1326507024
    %v2486 = vsel %vm2474, %v2468, %v2485
    %v2487 = vsel %vm2473, %v2484, %v2486
    %v2488 = vshll.u32 %v2448, 8
    %v2489 = vmul.u32.u64.compose %v2488, %v2487
    %v2490 = vextract.low.u32 %v2489
    %v2491 = vextract.high.u32 %v2489
    %v2492 = vmul.u32.u64.compose %v2488, %v2483
    %v2493 = vextract.low.u32 %v2492
    %v2494 = vextract.high.u32 %v2492
    %v2495 = vmul.u32 %v2488, %v2479
    %v2496 = vadd.s32 %v2491, %v2493
    %vm2497 = vc.u32 %v2491, %v2493
    %v2498 = vadd.s32 %v2494, 1
    %v2499 = vsel %vm2497, %v2498, %v2494
    %v2500 = vadd.s32 %v2495, %v2499
    %v2501 = vadd.s32 %v2500, 536870912
    %v2502 = vshrl.u32 %v2501, 30
    %v2503 = vshll.u32 %v2502, 30
    %v2504 = vsub.s32 %v2500, %v2503
    %vm2505 = vcmp.lt.s32.totalorder %v2504, 0
    %v2506 = vsub.s32 0, %v2504
    %v2507 = vsel %vm2505, %v2506, %v2504
    %v2508 = vclz %v2507
    %v2509 = vsub.s32 %v2508, 2
    %vm2510 = vcmp.gt.s32.totalorder 0, %v2509
    %v2511 = vsel %vm2510, 0, %v2509
    %v2512 = vsub.s32 32, %v2511
    %v2513 = vshll.u32 %v2504, %v2511
    %v2514 = vshrl.u32 %v2496, %v2512
    %v2515 = vor.u32 %v2513, %v2514
    %v2516 = vsub.s32 4294967266, %v2511
    %v2517 = vadd.s32 %v2516, 127
    %v2518 = vshll.u32 %v2517, 23
    %v2519 = vor.u32 4788187, %v2518
    %v2520 = vand.u32 2147483647, %v2519
    %v2522 = vcvt.s32.f32 %v2515
    %v2523 = vmul.f32 %v2522, %v2520
    %v2524 = vxor.u32 %v2523, 2147483648
    %v2525 = vsel %vm2442, %v2524, %v2523
    %v2526 = vsub.s32 4, %v2502
    %v2527 = vsel %vm2442, %v2526, %v2502
    %v2528 = vsel %vm2441, %v2021, %v2525
    %v2529 = vsel %vm2441, 0, %v2527
    %v2530 = vcosq.f32.pop %v2528
    %v2531 = vsinq.f32.pop %v2528
    %vm2532 = vweird.f32 %v2021
    %v2533 = vadd.s32 %v2529, 3
    %v2534 = vand.u32 %v2533, 3
    %vm2535 = vcmp.lt.s32.totalorder %v2534, 2
    %vm2536 = vcmp.eq.s32.totalorder %v2534, 0
    %v2537 = vxor.u32 %v2531, 2147483648
    %v2538 = vsel %vm2536, %v2530, %v2537
    %vm2539 = vcmp.eq.s32.totalorder %v2534, 2
    %v2540 = vxor.u32 %v2530, 2147483648
    %v2541 = vsel %vm2539, %v2540, %v2531
    %v2542 = vsel %vm2535, %v2538, %v2541
    %v2543 = vsel %vm2532, nan, %v2542
    %2544 = vst [vmem:[#allocation5] sm:$0xff] %v2127
    %2545 = vst [vmem:[#allocation5 + $0x8] sm:$0xff] %v2231
    %2546 = vst [vmem:[#allocation5 + $0x10] sm:$0xff] %v2335
    %2547 = vst [vmem:[#allocation5 + $0x18] sm:$0xff] %v2439
    %2548 = vst [vmem:[#allocation5 + $0x20] sm:$0xff] %v2543
    // Predicated region
    $region26: #{tpu_custom_call.1} parent=1 // pred_check
      _
    $region27: #{tpu_custom_call.1} parent=1 // pred_check_branch
      %2550 = sbr.rel (0) target = $region29
    $region28: #{tpu_custom_call.1} parent=1 // pred_region
      %s2552 = ssub.s32 640, 640
      %2553 = vsyncadd [#allocation4], %s2552
      %s2554 = sshll.u32 [#allocation5], 4
      %s2555 = int_to_ptr.vmem [resolvable:$true] %s2554
      %2560 = dma.vmem_to_hbm [thread:$0]  %s2555, 640, %s5, [#allocation4], 128, 128, 8
    $region29: #{tpu_custom_call.1} parent=1 // pred_fallthru
      _
    // Predicated region
    $region30: #{tpu_custom_call.1} parent=1 // pred_check
      _
    $region31: #{tpu_custom_call.1} parent=1 // pred_check_branch
      %2562 = sbr.rel (0) target = $region33
    $region32: #{tpu_custom_call.1} parent=1 // pred_region
      %2563 = dma.done [#allocation4], 640
    $region33: #{tpu_custom_call.1} parent=1 // pred_fallthru
      _
    %2564 = vsyncpa [#allocation3], 1
    %2565 = vsyncpa [#allocation4], 1

</llo_original>
